<compile_context>
chip_gen: v6e
topology: v6e:2x2x1
jax: 0.10.0
libtpu: 0.0.40
codegen_flags: <defaults>
</compile_context>

<pallas_src>
import functools

import jax
import jax.numpy as jnp
from jax import lax
from jax.experimental import pallas as pl
from jax.experimental.pallas import tpu as pltpu

PAD = 128          # padded feature width (lane dimension)
N_LAYERS = 11      # number of Linear layers
OUT_DIM = 2        # true output width of fc11 (softmax over these columns)
DEFAULT_TB = 512   # batch tile (rows per grid step)


def _round_up(n, m):
    return (n + m - 1) // m * m


def _cdiv(a, b):
    return -(-a // b)


def _choose_batch_tile(batch, tb=DEFAULT_TB):
    """Pick the batch tile: big (>=512) to amortize weight pushes, multiple of
    8 sublanes (or the full batch for tiny inputs), and an even grid-step count
    when >1 so the v7x megacore stays balanced."""
    if batch <= tb:
        return batch, 1                       # single step covers the batch
    tb_eff = tb                               # DEFAULT_TB is a multiple of 8
    steps = _cdiv(batch, tb_eff)
    if steps % 2 == 1:                        # v7x: even number of grid steps
        tb_eff = _round_up(_cdiv(batch, steps + 1), 8)
        steps = _cdiv(batch, tb_eff)
    return tb_eff, steps


def dnn_kernel(x_ref, w1_ref, w_ref, b_ref, o_ref):
    """Fused 11-layer MLP + softmax for one batch tile.

    x_ref : (TB, in_dim)    f32  -- input activations (unpadded features)
    w1_ref: (in_dim, 128)   bf16 -- fc1 weight, stored (in, out)
    w_ref : (10, 128, 128)  bf16 -- fc2..fc11 weights, (in, out), zero padded
    b_ref : (11, 1, 128)    f32  -- biases, zero padded
    o_ref : (TB, 128)       f32  -- softmax probs in columns [0, OUT_DIM)
    """
    b_all = b_ref[...]                        # hoist all biases once (~5.5 KiB)

    # Layer 1: (TB, in_dim) @ (in_dim, 128) + ReLU.
    z = jnp.dot(x_ref[...].astype(jnp.bfloat16), w1_ref[...],
                preferred_element_type=jnp.float32) + b_all[0]
    h = jnp.maximum(z, 0.0)

    # Layers 2..10: Linear + ReLU (statically unrolled, weights VMEM-resident).
    for i in range(N_LAYERS - 2):
        z = jnp.dot(h.astype(jnp.bfloat16), w_ref[i],
                    preferred_element_type=jnp.float32) + b_all[i + 1]
        h = jnp.maximum(z, 0.0)

    # Layer 11: Linear (no ReLU).
    z = jnp.dot(h.astype(jnp.bfloat16), w_ref[N_LAYERS - 2],
                preferred_element_type=jnp.float32) + b_all[N_LAYERS - 1]

    # Softmax over the first OUT_DIM lanes; padded lanes masked to -1e30 whose
    # exp underflows to exactly 0 (no post-exp mask needed).  Full 128-lane
    # store keeps the writeback as unmasked lane-dense vst.
    col = lax.broadcasted_iota(jnp.int32, z.shape, 1)
    z = jnp.where(col < OUT_DIM, z, -1e30)
    m = jnp.max(z, axis=1, keepdims=True)
    e = jnp.exp(z - m)
    s = jnp.sum(e, axis=1, keepdims=True)
    o_ref[...] = e * pl.reciprocal(s, approx=True)


@functools.partial(jax.jit, static_argnames=("tb", "single_buffer_weights"))
def _dnn_forward_impl(x, w1, w_stack, b_stack, *, tb, single_buffer_weights):
    batch, in_dim = x.shape
    steps = _cdiv(batch, tb)
    # Weights/biases have constant block indices -> DMA'd once, VMEM-resident;
    # single-buffer them (second pipeline buffer would never be used).
    resident = (dict(pipeline_mode=pl.Buffered(1))
                if single_buffer_weights else {})
    return pl.pallas_call(
        dnn_kernel,
        out_shape=jax.ShapeDtypeStruct((batch, PAD), jnp.float32),
        grid=(steps,),
        in_specs=[
            # Activations: tiled over the batch grid (auto double-buffered).
            pl.BlockSpec((tb, in_dim), lambda i: (i, 0)),
            pl.BlockSpec((in_dim, PAD), lambda i: (0, 0), **resident),
            pl.BlockSpec((N_LAYERS - 1, PAD, PAD), lambda i: (0, 0, 0), **resident),
            pl.BlockSpec((N_LAYERS, 1, PAD), lambda i: (0, 0, 0), **resident),
        ],
        out_specs=pl.BlockSpec((tb, PAD), lambda i: (i, 0)),
        compiler_params=pltpu.CompilerParams(
            dimension_semantics=("parallel",),   # batch tiles are independent
        ),
    )(x, w1, w_stack, b_stack)


_SINGLE_BUFFER_WEIGHTS_OK = True  # flipped off if pl.Buffered(1) is rejected


def dnn_forward(x, w1, w_stack, b_stack, *, tb=DEFAULT_TB):
    """x: (batch, input_dim) f32 -> (batch, 2) softmax probabilities."""
    global _SINGLE_BUFFER_WEIGHTS_OK
    batch, _ = x.shape
    tb_eff, _ = _choose_batch_tile(batch, tb)
    out = None
    if _SINGLE_BUFFER_WEIGHTS_OK:
        try:
            out = jax.block_until_ready(
                _dnn_forward_impl(x, w1, w_stack, b_stack,
                                  tb=tb_eff, single_buffer_weights=True))
        except Exception:
            # This jax/libtpu rejects single-buffered specs: fall back to the
            # default (still constant-index, VMEM-resident) buffering.
            _SINGLE_BUFFER_WEIGHTS_OK = False
    if out is None:
        out = _dnn_forward_impl(x, w1, w_stack, b_stack,
                                tb=tb_eff, single_buffer_weights=False)
    return out[:batch, :OUT_DIM]


def make_params(input_dim, key):
    """Kaiming-normal weights (fan_in, gain=sqrt(2)) as in the PyTorch
    init_weights, zero biases. Returns raw f32 per-layer params (for the
    reference) plus the kernel operands: w1 (in_dim,128) bf16, the zero-padded
    (10,128,128) bf16 weight stack and the (11,1,128) f32 bias stack."""
    dims = [input_dim, 128, 128, 64, 64, 32, 32, 16, 16, 8, 8, 2]
    w_raw, b_raw = [], []
    for i in range(N_LAYERS):
        fan_in, fan_out = dims[i], dims[i + 1]
        key, sub = jax.random.split(key)
        std = jnp.sqrt(2.0 / fan_in)
        w_raw.append(jax.random.normal(sub, (fan_in, fan_out), jnp.float32) * std)
        b_raw.append(jnp.zeros((fan_out,), jnp.float32))

    w1 = w_raw[0].astype(jnp.bfloat16)                      # fc1: (in_dim, 128)
    w_pad = []
    for i in range(1, N_LAYERS):
        fan_in, fan_out = dims[i], dims[i + 1]
        w_pad.append(jnp.zeros((PAD, PAD), jnp.float32)
                     .at[:fan_in, :fan_out].set(w_raw[i]).astype(jnp.bfloat16))
    w_stack = jnp.stack(w_pad)
    b_stack = jnp.stack(
        [jnp.zeros((1, PAD), jnp.float32).at[0, :dims[i + 1]].set(b_raw[i])
         for i in range(N_LAYERS)])
    return w_raw, b_raw, w1, w_stack, b_stack


def reference_forward_f32(x, w_raw, b_raw):
    """Pure-JAX f32 reference on the UNPADDED params (matches the PyTorch DNN)."""
    h = x
    for i in range(N_LAYERS - 1):
        h = jnp.maximum(h @ w_raw[i] + b_raw[i], 0.0)
    z = h @ w_raw[N_LAYERS - 1] + b_raw[N_LAYERS - 1]
    return jax.nn.softmax(z, axis=1)


def reference_forward_bf16(x, w_raw, b_raw):
    """Reference mimicking the kernel arithmetic: bf16 matmul inputs, f32
    accumulation and f32 elementwise math."""
    h = x
    for i in range(N_LAYERS - 1):
        z = jnp.dot(h.astype(jnp.bfloat16), w_raw[i].astype(jnp.bfloat16),
                    preferred_element_type=jnp.float32) + b_raw[i]
        h = jnp.maximum(z, 0.0)
    z = jnp.dot(h.astype(jnp.bfloat16), w_raw[-1].astype(jnp.bfloat16),
                preferred_element_type=jnp.float32) + b_raw[-1]
    return jax.nn.softmax(z, axis=1)


if __name__ == "__main__":
    key = jax.random.PRNGKey(0)
    batch, input_dim = 2, 32

    kx, kp, kx2 = jax.random.split(key, 3)
    x = jax.random.normal(kx, (batch, input_dim), jnp.float32)
    w_raw, b_raw, w1, w_stack, b_stack = make_params(input_dim, kp)

    # Small-batch run (the spec's shape): single grid step, full-batch tile.
    out = jax.block_until_ready(dnn_forward(x, w1, w_stack, b_stack))
    assert out.shape == (batch, OUT_DIM)
    ref16 = reference_forward_bf16(x, w_raw, b_raw)
    ref32 = reference_forward_f32(x, w_raw, b_raw)
    assert jnp.allclose(out, ref16, atol=5e-3), "mismatch vs bf16 reference"
    assert jnp.allclose(out, ref32, atol=6e-2), "mismatch vs f32 reference"
    assert jnp.allclose(jnp.sum(out, axis=1), 1.0, atol=5e-3), "softmax rows != 1"

    # Larger batch: exercises the batch grid, VMEM-resident weights and the
    # partial (out-of-bounds masked) last tile — no host-side batch padding.
    big_batch = 600
    xb = jax.random.normal(kx2, (big_batch, input_dim), jnp.float32)
    out_b = jax.block_until_ready(dnn_forward(xb, w1, w_stack, b_stack))
    assert out_b.shape == (big_batch, OUT_DIM)
    ref16_b = reference_forward_bf16(xb, w_raw, b_raw)
    ref32_b = reference_forward_f32(xb, w_raw, b_raw)
    assert jnp.allclose(out_b, ref16_b, atol=5e-3), "big-batch mismatch vs bf16 ref"
    assert jnp.allclose(out_b, ref32_b, atol=6e-2), "big-batch mismatch vs f32 ref"
    assert jnp.allclose(jnp.sum(out_b, axis=1), 1.0, atol=5e-3), "softmax rows != 1"

    print("KERNEL_OK")
</pallas_src>

<mosaic_0001>
module attributes {stable_mosaic.version = 11 : i64} {
  func.func @dnn_kernel(%arg0: i32, %arg1: memref<2x32xf32, #tpu.memory_space<vmem>>, %arg2: memref<32x128xbf16, #tpu.memory_space<vmem>>, %arg3: memref<10x128x128xbf16, #tpu.memory_space<vmem>>, %arg4: memref<11x1x128xf32, #tpu.memory_space<vmem>>, %arg5: memref<2x128xf32, #tpu.memory_space<vmem>>) attributes {dimension_semantics = [#tpu.dimension_semantics<parallel>], iteration_bounds = array<i64: 1>, scalar_prefetch = 0 : i64, scratch_operands = 0 : i64, tpu.core_type = #tpu.core_type<tc>, window_params = [{transform_indices = @transform_0, window_bounds = array<i64: 2, 32>}, {pipeline_mode = #tpu.pipeline_mode<synchronous>, transform_indices = @transform_1, window_bounds = array<i64: 32, 128>}, {pipeline_mode = #tpu.pipeline_mode<synchronous>, transform_indices = @transform_2, window_bounds = array<i64: 10, 128, 128>}, {pipeline_mode = #tpu.pipeline_mode<synchronous>, transform_indices = @transform_3, window_bounds = array<i64: 11, 1, 128>}, {transform_indices = @transform_4, window_bounds = array<i64: 2, 128>}]} {
    %c0 = arith.constant 0 : index
    %c0_0 = arith.constant 0 : index
    %c0_1 = arith.constant 0 : index
    %0 = vector.load %arg4[%c0, %c0_0, %c0_1] : memref<11x1x128xf32, #tpu.memory_space<vmem>>, vector<11x1x128xf32>
    %c0_2 = arith.constant 0 : index
    %c0_3 = arith.constant 0 : index
    %1 = vector.load %arg1[%c0_2, %c0_3] : memref<2x32xf32, #tpu.memory_space<vmem>>, vector<2x32xf32>
    %2 = arith.truncf %1 : vector<2x32xf32> to vector<2x32xbf16>
    %c0_4 = arith.constant 0 : index
    %c0_5 = arith.constant 0 : index
    %3 = vector.load %arg2[%c0_4, %c0_5] : memref<32x128xbf16, #tpu.memory_space<vmem>>, vector<32x128xbf16>
    %cst = arith.constant dense<0.000000e+00> : vector<2x128xf32>
    %4 = tpu.matmul %2, %3, %cst {dimension_numbers = #tpu.dot_dimension_numbers<[1], [0], [0], [1], [0, 0, 1, 1], [], []>} : vector<2x32xbf16>, vector<32x128xbf16>, vector<2x128xf32> -> vector<2x128xf32>
    %5 = vector.extract_strided_slice %0 {offsets = [0, 0, 0], sizes = [1, 1, 128], strides = [1, 1, 1]} : vector<11x1x128xf32> to vector<1x1x128xf32>
    %6 = vector.shape_cast %5 : vector<1x1x128xf32> to vector<1x128xf32>
    %7 = vector.broadcast %6 : vector<1x128xf32> to vector<2x128xf32>
    %8 = arith.addf %4, %7 : vector<2x128xf32>
    %cst_6 = arith.constant 0.000000e+00 : f32
    %9 = vector.broadcast %cst_6 : f32 to vector<2x128xf32>
    %10 = arith.maximumf %8, %9 : vector<2x128xf32>
    %11 = arith.truncf %10 : vector<2x128xf32> to vector<2x128xbf16>
    %c0_7 = arith.constant 0 : index
    %c0_8 = arith.constant 0 : index
    %c0_9 = arith.constant 0 : index
    %12 = vector.load %arg3[%c0_7, %c0_8, %c0_9] : memref<10x128x128xbf16, #tpu.memory_space<vmem>>, vector<1x128x128xbf16>
    %13 = vector.shape_cast %12 : vector<1x128x128xbf16> to vector<128x128xbf16>
    %cst_10 = arith.constant dense<0.000000e+00> : vector<2x128xf32>
    %14 = tpu.matmul %11, %13, %cst_10 {dimension_numbers = #tpu.dot_dimension_numbers<[1], [0], [0], [1], [0, 0, 1, 1], [], []>} : vector<2x128xbf16>, vector<128x128xbf16>, vector<2x128xf32> -> vector<2x128xf32>
    %15 = vector.extract_strided_slice %0 {offsets = [1, 0, 0], sizes = [1, 1, 128], strides = [1, 1, 1]} : vector<11x1x128xf32> to vector<1x1x128xf32>
    %16 = vector.shape_cast %15 : vector<1x1x128xf32> to vector<1x128xf32>
    %17 = vector.broadcast %16 : vector<1x128xf32> to vector<2x128xf32>
    %18 = arith.addf %14, %17 : vector<2x128xf32>
    %cst_11 = arith.constant 0.000000e+00 : f32
    %19 = vector.broadcast %cst_11 : f32 to vector<2x128xf32>
    %20 = arith.maximumf %18, %19 : vector<2x128xf32>
    %21 = arith.truncf %20 : vector<2x128xf32> to vector<2x128xbf16>
    %c1 = arith.constant 1 : index
    %c0_12 = arith.constant 0 : index
    %c0_13 = arith.constant 0 : index
    %22 = vector.load %arg3[%c1, %c0_12, %c0_13] : memref<10x128x128xbf16, #tpu.memory_space<vmem>>, vector<1x128x128xbf16>
    %23 = vector.shape_cast %22 : vector<1x128x128xbf16> to vector<128x128xbf16>
    %cst_14 = arith.constant dense<0.000000e+00> : vector<2x128xf32>
    %24 = tpu.matmul %21, %23, %cst_14 {dimension_numbers = #tpu.dot_dimension_numbers<[1], [0], [0], [1], [0, 0, 1, 1], [], []>} : vector<2x128xbf16>, vector<128x128xbf16>, vector<2x128xf32> -> vector<2x128xf32>
    %25 = vector.extract_strided_slice %0 {offsets = [2, 0, 0], sizes = [1, 1, 128], strides = [1, 1, 1]} : vector<11x1x128xf32> to vector<1x1x128xf32>
    %26 = vector.shape_cast %25 : vector<1x1x128xf32> to vector<1x128xf32>
    %27 = vector.broadcast %26 : vector<1x128xf32> to vector<2x128xf32>
    %28 = arith.addf %24, %27 : vector<2x128xf32>
    %cst_15 = arith.constant 0.000000e+00 : f32
    %29 = vector.broadcast %cst_15 : f32 to vector<2x128xf32>
    %30 = arith.maximumf %28, %29 : vector<2x128xf32>
    %31 = arith.truncf %30 : vector<2x128xf32> to vector<2x128xbf16>
    %c2 = arith.constant 2 : index
    %c0_16 = arith.constant 0 : index
    %c0_17 = arith.constant 0 : index
    %32 = vector.load %arg3[%c2, %c0_16, %c0_17] : memref<10x128x128xbf16, #tpu.memory_space<vmem>>, vector<1x128x128xbf16>
    %33 = vector.shape_cast %32 : vector<1x128x128xbf16> to vector<128x128xbf16>
    %cst_18 = arith.constant dense<0.000000e+00> : vector<2x128xf32>
    %34 = tpu.matmul %31, %33, %cst_18 {dimension_numbers = #tpu.dot_dimension_numbers<[1], [0], [0], [1], [0, 0, 1, 1], [], []>} : vector<2x128xbf16>, vector<128x128xbf16>, vector<2x128xf32> -> vector<2x128xf32>
    %35 = vector.extract_strided_slice %0 {offsets = [3, 0, 0], sizes = [1, 1, 128], strides = [1, 1, 1]} : vector<11x1x128xf32> to vector<1x1x128xf32>
    %36 = vector.shape_cast %35 : vector<1x1x128xf32> to vector<1x128xf32>
    %37 = vector.broadcast %36 : vector<1x128xf32> to vector<2x128xf32>
    %38 = arith.addf %34, %37 : vector<2x128xf32>
    %cst_19 = arith.constant 0.000000e+00 : f32
    %39 = vector.broadcast %cst_19 : f32 to vector<2x128xf32>
    %40 = arith.maximumf %38, %39 : vector<2x128xf32>
    %41 = arith.truncf %40 : vector<2x128xf32> to vector<2x128xbf16>
    %c3 = arith.constant 3 : index
    %c0_20 = arith.constant 0 : index
    %c0_21 = arith.constant 0 : index
    %42 = vector.load %arg3[%c3, %c0_20, %c0_21] : memref<10x128x128xbf16, #tpu.memory_space<vmem>>, vector<1x128x128xbf16>
    %43 = vector.shape_cast %42 : vector<1x128x128xbf16> to vector<128x128xbf16>
    %cst_22 = arith.constant dense<0.000000e+00> : vector<2x128xf32>
    %44 = tpu.matmul %41, %43, %cst_22 {dimension_numbers = #tpu.dot_dimension_numbers<[1], [0], [0], [1], [0, 0, 1, 1], [], []>} : vector<2x128xbf16>, vector<128x128xbf16>, vector<2x128xf32> -> vector<2x128xf32>
    %45 = vector.extract_strided_slice %0 {offsets = [4, 0, 0], sizes = [1, 1, 128], strides = [1, 1, 1]} : vector<11x1x128xf32> to vector<1x1x128xf32>
    %46 = vector.shape_cast %45 : vector<1x1x128xf32> to vector<1x128xf32>
    %47 = vector.broadcast %46 : vector<1x128xf32> to vector<2x128xf32>
    %48 = arith.addf %44, %47 : vector<2x128xf32>
    %cst_23 = arith.constant 0.000000e+00 : f32
    %49 = vector.broadcast %cst_23 : f32 to vector<2x128xf32>
    %50 = arith.maximumf %48, %49 : vector<2x128xf32>
    %51 = arith.truncf %50 : vector<2x128xf32> to vector<2x128xbf16>
    %c4 = arith.constant 4 : index
    %c0_24 = arith.constant 0 : index
    %c0_25 = arith.constant 0 : index
    %52 = vector.load %arg3[%c4, %c0_24, %c0_25] : memref<10x128x128xbf16, #tpu.memory_space<vmem>>, vector<1x128x128xbf16>
    %53 = vector.shape_cast %52 : vector<1x128x128xbf16> to vector<128x128xbf16>
    %cst_26 = arith.constant dense<0.000000e+00> : vector<2x128xf32>
    %54 = tpu.matmul %51, %53, %cst_26 {dimension_numbers = #tpu.dot_dimension_numbers<[1], [0], [0], [1], [0, 0, 1, 1], [], []>} : vector<2x128xbf16>, vector<128x128xbf16>, vector<2x128xf32> -> vector<2x128xf32>
    %55 = vector.extract_strided_slice %0 {offsets = [5, 0, 0], sizes = [1, 1, 128], strides = [1, 1, 1]} : vector<11x1x128xf32> to vector<1x1x128xf32>
    %56 = vector.shape_cast %55 : vector<1x1x128xf32> to vector<1x128xf32>
    %57 = vector.broadcast %56 : vector<1x128xf32> to vector<2x128xf32>
    %58 = arith.addf %54, %57 : vector<2x128xf32>
    %cst_27 = arith.constant 0.000000e+00 : f32
    %59 = vector.broadcast %cst_27 : f32 to vector<2x128xf32>
    %60 = arith.maximumf %58, %59 : vector<2x128xf32>
    %61 = arith.truncf %60 : vector<2x128xf32> to vector<2x128xbf16>
    %c5 = arith.constant 5 : index
    %c0_28 = arith.constant 0 : index
    %c0_29 = arith.constant 0 : index
    %62 = vector.load %arg3[%c5, %c0_28, %c0_29] : memref<10x128x128xbf16, #tpu.memory_space<vmem>>, vector<1x128x128xbf16>
    %63 = vector.shape_cast %62 : vector<1x128x128xbf16> to vector<128x128xbf16>
    %cst_30 = arith.constant dense<0.000000e+00> : vector<2x128xf32>
    %64 = tpu.matmul %61, %63, %cst_30 {dimension_numbers = #tpu.dot_dimension_numbers<[1], [0], [0], [1], [0, 0, 1, 1], [], []>} : vector<2x128xbf16>, vector<128x128xbf16>, vector<2x128xf32> -> vector<2x128xf32>
    %65 = vector.extract_strided_slice %0 {offsets = [6, 0, 0], sizes = [1, 1, 128], strides = [1, 1, 1]} : vector<11x1x128xf32> to vector<1x1x128xf32>
    %66 = vector.shape_cast %65 : vector<1x1x128xf32> to vector<1x128xf32>
    %67 = vector.broadcast %66 : vector<1x128xf32> to vector<2x128xf32>
    %68 = arith.addf %64, %67 : vector<2x128xf32>
    %cst_31 = arith.constant 0.000000e+00 : f32
    %69 = vector.broadcast %cst_31 : f32 to vector<2x128xf32>
    %70 = arith.maximumf %68, %69 : vector<2x128xf32>
    %71 = arith.truncf %70 : vector<2x128xf32> to vector<2x128xbf16>
    %c6 = arith.constant 6 : index
    %c0_32 = arith.constant 0 : index
    %c0_33 = arith.constant 0 : index
    %72 = vector.load %arg3[%c6, %c0_32, %c0_33] : memref<10x128x128xbf16, #tpu.memory_space<vmem>>, vector<1x128x128xbf16>
    %73 = vector.shape_cast %72 : vector<1x128x128xbf16> to vector<128x128xbf16>
    %cst_34 = arith.constant dense<0.000000e+00> : vector<2x128xf32>
    %74 = tpu.matmul %71, %73, %cst_34 {dimension_numbers = #tpu.dot_dimension_numbers<[1], [0], [0], [1], [0, 0, 1, 1], [], []>} : vector<2x128xbf16>, vector<128x128xbf16>, vector<2x128xf32> -> vector<2x128xf32>
    %75 = vector.extract_strided_slice %0 {offsets = [7, 0, 0], sizes = [1, 1, 128], strides = [1, 1, 1]} : vector<11x1x128xf32> to vector<1x1x128xf32>
    %76 = vector.shape_cast %75 : vector<1x1x128xf32> to vector<1x128xf32>
    %77 = vector.broadcast %76 : vector<1x128xf32> to vector<2x128xf32>
    %78 = arith.addf %74, %77 : vector<2x128xf32>
    %cst_35 = arith.constant 0.000000e+00 : f32
    %79 = vector.broadcast %cst_35 : f32 to vector<2x128xf32>
    %80 = arith.maximumf %78, %79 : vector<2x128xf32>
    %81 = arith.truncf %80 : vector<2x128xf32> to vector<2x128xbf16>
    %c7 = arith.constant 7 : index
    %c0_36 = arith.constant 0 : index
    %c0_37 = arith.constant 0 : index
    %82 = vector.load %arg3[%c7, %c0_36, %c0_37] : memref<10x128x128xbf16, #tpu.memory_space<vmem>>, vector<1x128x128xbf16>
    %83 = vector.shape_cast %82 : vector<1x128x128xbf16> to vector<128x128xbf16>
    %cst_38 = arith.constant dense<0.000000e+00> : vector<2x128xf32>
    %84 = tpu.matmul %81, %83, %cst_38 {dimension_numbers = #tpu.dot_dimension_numbers<[1], [0], [0], [1], [0, 0, 1, 1], [], []>} : vector<2x128xbf16>, vector<128x128xbf16>, vector<2x128xf32> -> vector<2x128xf32>
    %85 = vector.extract_strided_slice %0 {offsets = [8, 0, 0], sizes = [1, 1, 128], strides = [1, 1, 1]} : vector<11x1x128xf32> to vector<1x1x128xf32>
    %86 = vector.shape_cast %85 : vector<1x1x128xf32> to vector<1x128xf32>
    %87 = vector.broadcast %86 : vector<1x128xf32> to vector<2x128xf32>
    %88 = arith.addf %84, %87 : vector<2x128xf32>
    %cst_39 = arith.constant 0.000000e+00 : f32
    %89 = vector.broadcast %cst_39 : f32 to vector<2x128xf32>
    %90 = arith.maximumf %88, %89 : vector<2x128xf32>
    %91 = arith.truncf %90 : vector<2x128xf32> to vector<2x128xbf16>
    %c8 = arith.constant 8 : index
    %c0_40 = arith.constant 0 : index
    %c0_41 = arith.constant 0 : index
    %92 = vector.load %arg3[%c8, %c0_40, %c0_41] : memref<10x128x128xbf16, #tpu.memory_space<vmem>>, vector<1x128x128xbf16>
    %93 = vector.shape_cast %92 : vector<1x128x128xbf16> to vector<128x128xbf16>
    %cst_42 = arith.constant dense<0.000000e+00> : vector<2x128xf32>
    %94 = tpu.matmul %91, %93, %cst_42 {dimension_numbers = #tpu.dot_dimension_numbers<[1], [0], [0], [1], [0, 0, 1, 1], [], []>} : vector<2x128xbf16>, vector<128x128xbf16>, vector<2x128xf32> -> vector<2x128xf32>
    %95 = vector.extract_strided_slice %0 {offsets = [9, 0, 0], sizes = [1, 1, 128], strides = [1, 1, 1]} : vector<11x1x128xf32> to vector<1x1x128xf32>
    %96 = vector.shape_cast %95 : vector<1x1x128xf32> to vector<1x128xf32>
    %97 = vector.broadcast %96 : vector<1x128xf32> to vector<2x128xf32>
    %98 = arith.addf %94, %97 : vector<2x128xf32>
    %cst_43 = arith.constant 0.000000e+00 : f32
    %99 = vector.broadcast %cst_43 : f32 to vector<2x128xf32>
    %100 = arith.maximumf %98, %99 : vector<2x128xf32>
    %101 = arith.truncf %100 : vector<2x128xf32> to vector<2x128xbf16>
    %c9 = arith.constant 9 : index
    %c0_44 = arith.constant 0 : index
    %c0_45 = arith.constant 0 : index
    %102 = vector.load %arg3[%c9, %c0_44, %c0_45] : memref<10x128x128xbf16, #tpu.memory_space<vmem>>, vector<1x128x128xbf16>
    %103 = vector.shape_cast %102 : vector<1x128x128xbf16> to vector<128x128xbf16>
    %cst_46 = arith.constant dense<0.000000e+00> : vector<2x128xf32>
    %104 = tpu.matmul %101, %103, %cst_46 {dimension_numbers = #tpu.dot_dimension_numbers<[1], [0], [0], [1], [0, 0, 1, 1], [], []>} : vector<2x128xbf16>, vector<128x128xbf16>, vector<2x128xf32> -> vector<2x128xf32>
    %105 = vector.extract_strided_slice %0 {offsets = [10, 0, 0], sizes = [1, 1, 128], strides = [1, 1, 1]} : vector<11x1x128xf32> to vector<1x1x128xf32>
    %106 = vector.shape_cast %105 : vector<1x1x128xf32> to vector<1x128xf32>
    %107 = vector.broadcast %106 : vector<1x128xf32> to vector<2x128xf32>
    %108 = arith.addf %104, %107 : vector<2x128xf32>
    %109 = tpu.iota {dimensions = array<i32: 1>} : vector<2x128xi32>
    %c2_i32 = arith.constant 2 : i32
    %110 = vector.broadcast %c2_i32 : i32 to vector<2x128xi32>
    %111 = arith.cmpi slt, %109, %110 : vector<2x128xi32>
    %cst_47 = arith.constant -1.000000e+30 : f32
    %112 = vector.broadcast %cst_47 : f32 to vector<2x128xf32>
    %113 = arith.select %111, %108, %112 : vector<2x128xi1>, vector<2x128xf32>
    %cst_48 = arith.constant dense<0xFF800000> : vector<2xf32>
    %114 = vector.multi_reduction <maximumf>, %113, %cst_48 [1] : vector<2x128xf32> to vector<2xf32>
    %115 = vector.shape_cast %114 : vector<2xf32> to vector<2x1xf32>
    %116 = vector.broadcast %115 : vector<2x1xf32> to vector<2x128xf32>
    %117 = arith.subf %113, %116 : vector<2x128xf32>
    %118 = math.exp %117 : vector<2x128xf32>
    %cst_49 = arith.constant dense<0.000000e+00> : vector<2xf32>
    %119 = vector.multi_reduction <add>, %118, %cst_49 [1] : vector<2x128xf32> to vector<2xf32>
    %120 = vector.shape_cast %119 : vector<2xf32> to vector<2x1xf32>
    %121 = tpu.reciprocal %120 {approx = true} : vector<2x1xf32> -> vector<2x1xf32>
    %122 = vector.broadcast %121 : vector<2x1xf32> to vector<2x128xf32>
    %123 = arith.mulf %118, %122 : vector<2x128xf32>
    %c0_50 = arith.constant 0 : index
    %c0_51 = arith.constant 0 : index
    %124 = vector.load %arg5[%c0_50, %c0_51] : memref<2x128xf32, #tpu.memory_space<vmem>>, vector<2x128xf32>
    tpu.vector_store %arg5[%c0_50, %c0_51], %123 {strides = array<i32>} : memref<2x128xf32, #tpu.memory_space<vmem>>, vector<2x128xf32>,
    return
  }
  func.func @transform_0(%arg0: i32) -> (i32, i32) {
    %c0_i32 = arith.constant 0 : i32
    %c0_i32_0 = arith.constant 0 : i32
    return %arg0, %c0_i32 : i32, i32
  }
  func.func @transform_1(%arg0: i32) -> (i32, i32) {
    %c0_i32 = arith.constant 0 : i32
    %c0_i32_0 = arith.constant 0 : i32
    %c0_i32_1 = arith.constant 0 : i32
    return %c0_i32, %c0_i32_0 : i32, i32
  }
  func.func @transform_2(%arg0: i32) -> (i32, i32, i32) {
    %c0_i32 = arith.constant 0 : i32
    %c0_i32_0 = arith.constant 0 : i32
    %c0_i32_1 = arith.constant 0 : i32
    %c0_i32_2 = arith.constant 0 : i32
    return %c0_i32, %c0_i32_0, %c0_i32_1 : i32, i32, i32
  }
  func.func @transform_3(%arg0: i32) -> (i32, i32, i32) {
    %c0_i32 = arith.constant 0 : i32
    %c0_i32_0 = arith.constant 0 : i32
    %c0_i32_1 = arith.constant 0 : i32
    %c0_i32_2 = arith.constant 0 : i32
    return %c0_i32, %c0_i32_0, %c0_i32_1 : i32, i32, i32
  }
  func.func @transform_4(%arg0: i32) -> (i32, i32) {
    %c0_i32 = arith.constant 0 : i32
    %c0_i32_0 = arith.constant 0 : i32
    return %arg0, %c0_i32 : i32, i32
  }
}

module attributes {stable_mosaic.version = 11 : i64} {
  func.func @dnn_kernel(%arg0: i32, %arg1: memref<2x32xf32, #tpu.memory_space<vmem>>, %arg2: memref<32x128xbf16, #tpu.memory_space<vmem>>, %arg3: memref<10x128x128xbf16, #tpu.memory_space<vmem>>, %arg4: memref<11x1x128xf32, #tpu.memory_space<vmem>>, %arg5: memref<2x128xf32, #tpu.memory_space<vmem>>) attributes {dimension_semantics = [#tpu.dimension_semantics<parallel>], iteration_bounds = array<i64: 1>, scalar_prefetch = 0 : i64, scratch_operands = 0 : i64, tpu.core_type = #tpu.core_type<tc>, window_params = [{transform_indices = @transform_0, window_bounds = array<i64: 2, 32>}, {pipeline_mode = #tpu.pipeline_mode<synchronous>, transform_indices = @transform_1, window_bounds = array<i64: 32, 128>}, {pipeline_mode = #tpu.pipeline_mode<synchronous>, transform_indices = @transform_2, window_bounds = array<i64: 10, 128, 128>}, {pipeline_mode = #tpu.pipeline_mode<synchronous>, transform_indices = @transform_3, window_bounds = array<i64: 11, 1, 128>}, {transform_indices = @transform_4, window_bounds = array<i64: 2, 128>}]} {
    %c0 = arith.constant 0 : index
    %c0_0 = arith.constant 0 : index
    %c0_1 = arith.constant 0 : index
    %0 = vector.load %arg4[%c0, %c0_0, %c0_1] : memref<11x1x128xf32, #tpu.memory_space<vmem>>, vector<11x1x128xf32>
    %c0_2 = arith.constant 0 : index
    %c0_3 = arith.constant 0 : index
    %1 = vector.load %arg1[%c0_2, %c0_3] : memref<2x32xf32, #tpu.memory_space<vmem>>, vector<2x32xf32>
    %2 = arith.truncf %1 : vector<2x32xf32> to vector<2x32xbf16>
    %c0_4 = arith.constant 0 : index
    %c0_5 = arith.constant 0 : index
    %3 = vector.load %arg2[%c0_4, %c0_5] : memref<32x128xbf16, #tpu.memory_space<vmem>>, vector<32x128xbf16>
    %cst = arith.constant dense<0.000000e+00> : vector<2x128xf32>
    %4 = tpu.matmul %2, %3, %cst {dimension_numbers = #tpu.dot_dimension_numbers<[1], [0], [0], [1], [0, 0, 1, 1], [], []>} : vector<2x32xbf16>, vector<32x128xbf16>, vector<2x128xf32> -> vector<2x128xf32>
    %5 = vector.extract_strided_slice %0 {offsets = [0, 0, 0], sizes = [1, 1, 128], strides = [1, 1, 1]} : vector<11x1x128xf32> to vector<1x1x128xf32>
    %6 = vector.shape_cast %5 : vector<1x1x128xf32> to vector<1x128xf32>
    %7 = vector.broadcast %6 : vector<1x128xf32> to vector<2x128xf32>
    %8 = arith.addf %4, %7 : vector<2x128xf32>
    %cst_6 = arith.constant 0.000000e+00 : f32
    %9 = vector.broadcast %cst_6 : f32 to vector<2x128xf32>
    %10 = arith.maximumf %8, %9 : vector<2x128xf32>
    %11 = arith.truncf %10 : vector<2x128xf32> to vector<2x128xbf16>
    %c0_7 = arith.constant 0 : index
    %c0_8 = arith.constant 0 : index
    %c0_9 = arith.constant 0 : index
    %12 = vector.load %arg3[%c0_7, %c0_8, %c0_9] : memref<10x128x128xbf16, #tpu.memory_space<vmem>>, vector<1x128x128xbf16>
    %13 = vector.shape_cast %12 : vector<1x128x128xbf16> to vector<128x128xbf16>
    %cst_10 = arith.constant dense<0.000000e+00> : vector<2x128xf32>
    %14 = tpu.matmul %11, %13, %cst_10 {dimension_numbers = #tpu.dot_dimension_numbers<[1], [0], [0], [1], [0, 0, 1, 1], [], []>} : vector<2x128xbf16>, vector<128x128xbf16>, vector<2x128xf32> -> vector<2x128xf32>
    %15 = vector.extract_strided_slice %0 {offsets = [1, 0, 0], sizes = [1, 1, 128], strides = [1, 1, 1]} : vector<11x1x128xf32> to vector<1x1x128xf32>
    %16 = vector.shape_cast %15 : vector<1x1x128xf32> to vector<1x128xf32>
    %17 = vector.broadcast %16 : vector<1x128xf32> to vector<2x128xf32>
    %18 = arith.addf %14, %17 : vector<2x128xf32>
    %cst_11 = arith.constant 0.000000e+00 : f32
    %19 = vector.broadcast %cst_11 : f32 to vector<2x128xf32>
    %20 = arith.maximumf %18, %19 : vector<2x128xf32>
    %21 = arith.truncf %20 : vector<2x128xf32> to vector<2x128xbf16>
    %c1 = arith.constant 1 : index
    %c0_12 = arith.constant 0 : index
    %c0_13 = arith.constant 0 : index
    %22 = vector.load %arg3[%c1, %c0_12, %c0_13] : memref<10x128x128xbf16, #tpu.memory_space<vmem>>, vector<1x128x128xbf16>
    %23 = vector.shape_cast %22 : vector<1x128x128xbf16> to vector<128x128xbf16>
    %cst_14 = arith.constant dense<0.000000e+00> : vector<2x128xf32>
    %24 = tpu.matmul %21, %23, %cst_14 {dimension_numbers = #tpu.dot_dimension_numbers<[1], [0], [0], [1], [0, 0, 1, 1], [], []>} : vector<2x128xbf16>, vector<128x128xbf16>, vector<2x128xf32> -> vector<2x128xf32>
    %25 = vector.extract_strided_slice %0 {offsets = [2, 0, 0], sizes = [1, 1, 128], strides = [1, 1, 1]} : vector<11x1x128xf32> to vector<1x1x128xf32>
    %26 = vector.shape_cast %25 : vector<1x1x128xf32> to vector<1x128xf32>
    %27 = vector.broadcast %26 : vector<1x128xf32> to vector<2x128xf32>
    %28 = arith.addf %24, %27 : vector<2x128xf32>
    %cst_15 = arith.constant 0.000000e+00 : f32
    %29 = vector.broadcast %cst_15 : f32 to vector<2x128xf32>
    %30 = arith.maximumf %28, %29 : vector<2x128xf32>
    %31 = arith.truncf %30 : vector<2x128xf32> to vector<2x128xbf16>
    %c2 = arith.constant 2 : index
    %c0_16 = arith.constant 0 : index
    %c0_17 = arith.constant 0 : index
    %32 = vector.load %arg3[%c2, %c0_16, %c0_17] : memref<10x128x128xbf16, #tpu.memory_space<vmem>>, vector<1x128x128xbf16>
    %33 = vector.shape_cast %32 : vector<1x128x128xbf16> to vector<128x128xbf16>
    %cst_18 = arith.constant dense<0.000000e+00> : vector<2x128xf32>
    %34 = tpu.matmul %31, %33, %cst_18 {dimension_numbers = #tpu.dot_dimension_numbers<[1], [0], [0], [1], [0, 0, 1, 1], [], []>} : vector<2x128xbf16>, vector<128x128xbf16>, vector<2x128xf32> -> vector<2x128xf32>
    %35 = vector.extract_strided_slice %0 {offsets = [3, 0, 0], sizes = [1, 1, 128], strides = [1, 1, 1]} : vector<11x1x128xf32> to vector<1x1x128xf32>
    %36 = vector.shape_cast %35 : vector<1x1x128xf32> to vector<1x128xf32>
    %37 = vector.broadcast %36 : vector<1x128xf32> to vector<2x128xf32>
    %38 = arith.addf %34, %37 : vector<2x128xf32>
    %cst_19 = arith.constant 0.000000e+00 : f32
    %39 = vector.broadcast %cst_19 : f32 to vector<2x128xf32>
    %40 = arith.maximumf %38, %39 : vector<2x128xf32>
    %41 = arith.truncf %40 : vector<2x128xf32> to vector<2x128xbf16>
    %c3 = arith.constant 3 : index
    %c0_20 = arith.constant 0 : index
    %c0_21 = arith.constant 0 : index
    %42 = vector.load %arg3[%c3, %c0_20, %c0_21] : memref<10x128x128xbf16, #tpu.memory_space<vmem>>, vector<1x128x128xbf16>
    %43 = vector.shape_cast %42 : vector<1x128x128xbf16> to vector<128x128xbf16>
    %cst_22 = arith.constant dense<0.000000e+00> : vector<2x128xf32>
    %44 = tpu.matmul %41, %43, %cst_22 {dimension_numbers = #tpu.dot_dimension_numbers<[1], [0], [0], [1], [0, 0, 1, 1], [], []>} : vector<2x128xbf16>, vector<128x128xbf16>, vector<2x128xf32> -> vector<2x128xf32>
    %45 = vector.extract_strided_slice %0 {offsets = [4, 0, 0], sizes = [1, 1, 128], strides = [1, 1, 1]} : vector<11x1x128xf32> to vector<1x1x128xf32>
    %46 = vector.shape_cast %45 : vector<1x1x128xf32> to vector<1x128xf32>
    %47 = vector.broadcast %46 : vector<1x128xf32> to vector<2x128xf32>
    %48 = arith.addf %44, %47 : vector<2x128xf32>
    %cst_23 = arith.constant 0.000000e+00 : f32
    %49 = vector.broadcast %cst_23 : f32 to vector<2x128xf32>
    %50 = arith.maximumf %48, %49 : vector<2x128xf32>
    %51 = arith.truncf %50 : vector<2x128xf32> to vector<2x128xbf16>
    %c4 = arith.constant 4 : index
    %c0_24 = arith.constant 0 : index
    %c0_25 = arith.constant 0 : index
    %52 = vector.load %arg3[%c4, %c0_24, %c0_25] : memref<10x128x128xbf16, #tpu.memory_space<vmem>>, vector<1x128x128xbf16>
    %53 = vector.shape_cast %52 : vector<1x128x128xbf16> to vector<128x128xbf16>
    %cst_26 = arith.constant dense<0.000000e+00> : vector<2x128xf32>
    %54 = tpu.matmul %51, %53, %cst_26 {dimension_numbers = #tpu.dot_dimension_numbers<[1], [0], [0], [1], [0, 0, 1, 1], [], []>} : vector<2x128xbf16>, vector<128x128xbf16>, vector<2x128xf32> -> vector<2x128xf32>
    %55 = vector.extract_strided_slice %0 {offsets = [5, 0, 0], sizes = [1, 1, 128], strides = [1, 1, 1]} : vector<11x1x128xf32> to vector<1x1x128xf32>
    %56 = vector.shape_cast %55 : vector<1x1x128xf32> to vector<1x128xf32>
    %57 = vector.broadcast %56 : vector<1x128xf32> to vector<2x128xf32>
    %58 = arith.addf %54, %57 : vector<2x128xf32>
    %cst_27 = arith.constant 0.000000e+00 : f32
    %59 = vector.broadcast %cst_27 : f32 to vector<2x128xf32>
    %60 = arith.maximumf %58, %59 : vector<2x128xf32>
    %61 = arith.truncf %60 : vector<2x128xf32> to vector<2x128xbf16>
    %c5 = arith.constant 5 : index
    %c0_28 = arith.constant 0 : index
    %c0_29 = arith.constant 0 : index
    %62 = vector.load %arg3[%c5, %c0_28, %c0_29] : memref<10x128x128xbf16, #tpu.memory_space<vmem>>, vector<1x128x128xbf16>
    %63 = vector.shape_cast %62 : vector<1x128x128xbf16> to vector<128x128xbf16>
    %cst_30 = arith.constant dense<0.000000e+00> : vector<2x128xf32>
    %64 = tpu.matmul %61, %63, %cst_30 {dimension_numbers = #tpu.dot_dimension_numbers<[1], [0], [0], [1], [0, 0, 1, 1], [], []>} : vector<2x128xbf16>, vector<128x128xbf16>, vector<2x128xf32> -> vector<2x128xf32>
    %65 = vector.extract_strided_slice %0 {offsets = [6, 0, 0], sizes = [1, 1, 128], strides = [1, 1, 1]} : vector<11x1x128xf32> to vector<1x1x128xf32>
    %66 = vector.shape_cast %65 : vector<1x1x128xf32> to vector<1x128xf32>
    %67 = vector.broadcast %66 : vector<1x128xf32> to vector<2x128xf32>
    %68 = arith.addf %64, %67 : vector<2x128xf32>
    %cst_31 = arith.constant 0.000000e+00 : f32
    %69 = vector.broadcast %cst_31 : f32 to vector<2x128xf32>
    %70 = arith.maximumf %68, %69 : vector<2x128xf32>
    %71 = arith.truncf %70 : vector<2x128xf32> to vector<2x128xbf16>
    %c6 = arith.constant 6 : index
    %c0_32 = arith.constant 0 : index
    %c0_33 = arith.constant 0 : index
    %72 = vector.load %arg3[%c6, %c0_32, %c0_33] : memref<10x128x128xbf16, #tpu.memory_space<vmem>>, vector<1x128x128xbf16>
    %73 = vector.shape_cast %72 : vector<1x128x128xbf16> to vector<128x128xbf16>
    %cst_34 = arith.constant dense<0.000000e+00> : vector<2x128xf32>
    %74 = tpu.matmul %71, %73, %cst_34 {dimension_numbers = #tpu.dot_dimension_numbers<[1], [0], [0], [1], [0, 0, 1, 1], [], []>} : vector<2x128xbf16>, vector<128x128xbf16>, vector<2x128xf32> -> vector<2x128xf32>
    %75 = vector.extract_strided_slice %0 {offsets = [7, 0, 0], sizes = [1, 1, 128], strides = [1, 1, 1]} : vector<11x1x128xf32> to vector<1x1x128xf32>
    %76 = vector.shape_cast %75 : vector<1x1x128xf32> to vector<1x128xf32>
    %77 = vector.broadcast %76 : vector<1x128xf32> to vector<2x128xf32>
    %78 = arith.addf %74, %77 : vector<2x128xf32>
    %cst_35 = arith.constant 0.000000e+00 : f32
    %79 = vector.broadcast %cst_35 : f32 to vector<2x128xf32>
    %80 = arith.maximumf %78, %79 : vector<2x128xf32>
    %81 = arith.truncf %80 : vector<2x128xf32> to vector<2x128xbf16>
    %c7 = arith.constant 7 : index
    %c0_36 = arith.constant 0 : index
    %c0_37 = arith.constant 0 : index
    %82 = vector.load %arg3[%c7, %c0_36, %c0_37] : memref<10x128x128xbf16, #tpu.memory_space<vmem>>, vector<1x128x128xbf16>
    %83 = vector.shape_cast %82 : vector<1x128x128xbf16> to vector<128x128xbf16>
    %cst_38 = arith.constant dense<0.000000e+00> : vector<2x128xf32>
    %84 = tpu.matmul %81, %83, %cst_38 {dimension_numbers = #tpu.dot_dimension_numbers<[1], [0], [0], [1], [0, 0, 1, 1], [], []>} : vector<2x128xbf16>, vector<128x128xbf16>, vector<2x128xf32> -> vector<2x128xf32>
    %85 = vector.extract_strided_slice %0 {offsets = [8, 0, 0], sizes = [1, 1, 128], strides = [1, 1, 1]} : vector<11x1x128xf32> to vector<1x1x128xf32>
    %86 = vector.shape_cast %85 : vector<1x1x128xf32> to vector<1x128xf32>
    %87 = vector.broadcast %86 : vector<1x128xf32> to vector<2x128xf32>
    %88 = arith.addf %84, %87 : vector<2x128xf32>
    %cst_39 = arith.constant 0.000000e+00 : f32
    %89 = vector.broadcast %cst_39 : f32 to vector<2x128xf32>
    %90 = arith.maximumf %88, %89 : vector<2x128xf32>
    %91 = arith.truncf %90 : vector<2x128xf32> to vector<2x128xbf16>
    %c8 = arith.constant 8 : index
    %c0_40 = arith.constant 0 : index
    %c0_41 = arith.constant 0 : index
    %92 = vector.load %arg3[%c8, %c0_40, %c0_41] : memref<10x128x128xbf16, #tpu.memory_space<vmem>>, vector<1x128x128xbf16>
    %93 = vector.shape_cast %92 : vector<1x128x128xbf16> to vector<128x128xbf16>
    %cst_42 = arith.constant dense<0.000000e+00> : vector<2x128xf32>
    %94 = tpu.matmul %91, %93, %cst_42 {dimension_numbers = #tpu.dot_dimension_numbers<[1], [0], [0], [1], [0, 0, 1, 1], [], []>} : vector<2x128xbf16>, vector<128x128xbf16>, vector<2x128xf32> -> vector<2x128xf32>
    %95 = vector.extract_strided_slice %0 {offsets = [9, 0, 0], sizes = [1, 1, 128], strides = [1, 1, 1]} : vector<11x1x128xf32> to vector<1x1x128xf32>
    %96 = vector.shape_cast %95 : vector<1x1x128xf32> to vector<1x128xf32>
    %97 = vector.broadcast %96 : vector<1x128xf32> to vector<2x128xf32>
    %98 = arith.addf %94, %97 : vector<2x128xf32>
    %cst_43 = arith.constant 0.000000e+00 : f32
    %99 = vector.broadcast %cst_43 : f32 to vector<2x128xf32>
    %100 = arith.maximumf %98, %99 : vector<2x128xf32>
    %101 = arith.truncf %100 : vector<2x128xf32> to vector<2x128xbf16>
    %c9 = arith.constant 9 : index
    %c0_44 = arith.constant 0 : index
    %c0_45 = arith.constant 0 : index
    %102 = vector.load %arg3[%c9, %c0_44, %c0_45] : memref<10x128x128xbf16, #tpu.memory_space<vmem>>, vector<1x128x128xbf16>
    %103 = vector.shape_cast %102 : vector<1x128x128xbf16> to vector<128x128xbf16>
    %cst_46 = arith.constant dense<0.000000e+00> : vector<2x128xf32>
    %104 = tpu.matmul %101, %103, %cst_46 {dimension_numbers = #tpu.dot_dimension_numbers<[1], [0], [0], [1], [0, 0, 1, 1], [], []>} : vector<2x128xbf16>, vector<128x128xbf16>, vector<2x128xf32> -> vector<2x128xf32>
    %105 = vector.extract_strided_slice %0 {offsets = [10, 0, 0], sizes = [1, 1, 128], strides = [1, 1, 1]} : vector<11x1x128xf32> to vector<1x1x128xf32>
    %106 = vector.shape_cast %105 : vector<1x1x128xf32> to vector<1x128xf32>
    %107 = vector.broadcast %106 : vector<1x128xf32> to vector<2x128xf32>
    %108 = arith.addf %104, %107 : vector<2x128xf32>
    %109 = tpu.iota {dimensions = array<i32: 1>} : vector<2x128xi32>
    %c2_i32 = arith.constant 2 : i32
    %110 = vector.broadcast %c2_i32 : i32 to vector<2x128xi32>
    %111 = arith.cmpi slt, %109, %110 : vector<2x128xi32>
    %cst_47 = arith.constant -1.000000e+30 : f32
    %112 = vector.broadcast %cst_47 : f32 to vector<2x128xf32>
    %113 = arith.select %111, %108, %112 : vector<2x128xi1>, vector<2x128xf32>
    %cst_48 = arith.constant dense<0xFF800000> : vector<2xf32>
    %114 = vector.multi_reduction <maximumf>, %113, %cst_48 [1] : vector<2x128xf32> to vector<2xf32>
    %115 = vector.shape_cast %114 : vector<2xf32> to vector<2x1xf32>
    %116 = vector.broadcast %115 : vector<2x1xf32> to vector<2x128xf32>
    %117 = arith.subf %113, %116 : vector<2x128xf32>
    %118 = math.exp %117 : vector<2x128xf32>
    %cst_49 = arith.constant dense<0.000000e+00> : vector<2xf32>
    %119 = vector.multi_reduction <add>, %118, %cst_49 [1] : vector<2x128xf32> to vector<2xf32>
    %120 = vector.shape_cast %119 : vector<2xf32> to vector<2x1xf32>
    %121 = tpu.reciprocal %120 {approx = true} : vector<2x1xf32> -> vector<2x1xf32>
    %122 = vector.broadcast %121 : vector<2x1xf32> to vector<2x128xf32>
    %123 = arith.mulf %118, %122 : vector<2x128xf32>
    %c0_50 = arith.constant 0 : index
    %c0_51 = arith.constant 0 : index
    %124 = vector.load %arg5[%c0_50, %c0_51] : memref<2x128xf32, #tpu.memory_space<vmem>>, vector<2x128xf32>
    tpu.vector_store %arg5[%c0_50, %c0_51], %123 {strides = array<i32>} : memref<2x128xf32, #tpu.memory_space<vmem>>, vector<2x128xf32>,
    return
  }
  func.func @transform_0(%arg0: i32) -> (i32, i32) {
    %c0_i32 = arith.constant 0 : i32
    %c0_i32_0 = arith.constant 0 : i32
    return %arg0, %c0_i32 : i32, i32
  }
  func.func @transform_1(%arg0: i32) -> (i32, i32) {
    %c0_i32 = arith.constant 0 : i32
    %c0_i32_0 = arith.constant 0 : i32
    %c0_i32_1 = arith.constant 0 : i32
    return %c0_i32, %c0_i32_0 : i32, i32
  }
  func.func @transform_2(%arg0: i32) -> (i32, i32, i32) {
    %c0_i32 = arith.constant 0 : i32
    %c0_i32_0 = arith.constant 0 : i32
    %c0_i32_1 = arith.constant 0 : i32
    %c0_i32_2 = arith.constant 0 : i32
    return %c0_i32, %c0_i32_0, %c0_i32_1 : i32, i32, i32
  }
  func.func @transform_3(%arg0: i32) -> (i32, i32, i32) {
    %c0_i32 = arith.constant 0 : i32
    %c0_i32_0 = arith.constant 0 : i32
    %c0_i32_1 = arith.constant 0 : i32
    %c0_i32_2 = arith.constant 0 : i32
    return %c0_i32, %c0_i32_0, %c0_i32_1 : i32, i32, i32
  }
  func.func @transform_4(%arg0: i32) -> (i32, i32) {
    %c0_i32 = arith.constant 0 : i32
    %c0_i32_0 = arith.constant 0 : i32
    return %arg0, %c0_i32 : i32, i32
  }
}

</mosaic_0001>

<llo_original>
// kernel: _dnn_forward_impl.1
$region0: #{_dnn_forward_impl.1}
  #allocation0 [shape = 'u32[]', space=smem, size = 0x4, offset = 0x4, fixed_abs, tag = 'smem constant byte address 0x4 - core index']
  #allocation1 [shape = 'u32[144,128]{1,0:T(1,128)}', space=vmem, size = 0x12000, scoped, tag = 'internal scratch']
  %s0 = inlined_call_operand.hbm [shape: f32[2,32], index: 0, kind: input, shape index: {}]
  %s1 = inlined_call_operand.hbm [shape: bf16[32,128], index: 1, kind: input, shape index: {}]
  %s2 = inlined_call_operand.hbm [shape: bf16[10,128,128], index: 2, kind: input, shape index: {}]
  %s3 = inlined_call_operand.hbm [shape: f32[11,1,128], index: 3, kind: input, shape index: {}]
  %s4 = inlined_call_operand.hbm [shape: f32[2,128], index: 4, kind: output, shape index: {}]
  %s5 = sld [smem:[#allocation0]]
  $region42: #{_dnn_forward_impl.1} parent=0
    _
  %s7 = ssub.s32 1, %s5
  %s8 = scalar_select 0, %s7, %s5
  $region1: #{_dnn_forward_impl.1} parent=0
    #allocation2 [shape = 'u8[1024]{0}', space=vmem, size = 0x400, scoped, tag = 'input window, operand 0, single buffered']
    #allocation3 [shape = 's32[1]{0}', space=sflag, size = 0x4, scoped, tag = 'scoped memory for _dnn_forward_impl.1']
    #allocation4 [shape = 's32[1]{0}', space=sflag, size = 0x4, scoped, tag = 'scoped memory for _dnn_forward_impl.1']
    #allocation5 [shape = 'u8[8192]{0}', space=vmem, size = 0x2000, scoped, tag = 'input window, operand 1, single buffered']
    #allocation6 [shape = 's32[1]{0}', space=sflag, size = 0x4, scoped, tag = 'scoped memory for _dnn_forward_impl.1']
    #allocation7 [shape = 'u8[327680]{0}', space=vmem, size = 0x50000, scoped, tag = 'input window, operand 2, single buffered']
    #allocation8 [shape = 'u8[5632]{0}', space=vmem, size = 0x1800, scoped, tag = 'input window, operand 3, single buffered']
    #allocation9 [shape = 's32[1]{0}', space=sflag, size = 0x4, scoped, tag = 'scoped memory for _dnn_forward_impl.1']
    #allocation10 [shape = 'u8[1024]{0}', space=vmem, size = 0x400, scoped, tag = 'output window, operand 0, single buffered']
    %9 = vsyncpa [#allocation3], 0
    %10 = vsyncpa [#allocation6], 0
    %11 = vsyncpa [#allocation9], 0
    %12 = vsyncpa [#allocation4], 0
    // Predicated region
    $region2: #{_dnn_forward_impl.1} parent=1 // pred_check
      _
    $region3: #{_dnn_forward_impl.1} parent=1 // pred_check_branch
      %14 = sbr.rel (0) target = $region5
    $region4: #{_dnn_forward_impl.1} parent=1 // pred_region
      %s16 = ssub.s32 32, 32
      %17 = vsyncadd [#allocation3], %s16
      %s19 = sshll.u32 [#allocation2], 4
      %s20 = int_to_ptr.vmem [resolvable:$true] %s19
      %22 = dma.hbm_to_vmem [thread:$0]  %s0, 32, %s20, [#allocation3]
    $region5: #{_dnn_forward_impl.1} parent=1 // pred_fallthru
      _
    // Predicated region
    $region6: #{_dnn_forward_impl.1} parent=1 // pred_check
      _
    $region7: #{_dnn_forward_impl.1} parent=1 // pred_check_branch
      %24 = sbr.rel (0) target = $region9
    $region8: #{_dnn_forward_impl.1} parent=1 // pred_region
      %s26 = ssub.s32 256, 256
      %27 = vsyncadd [#allocation6], %s26
      %s28 = sshll.u32 [#allocation5], 4
      %s29 = int_to_ptr.vmem [resolvable:$true] %s28
      %34 = dma.hbm_to_vmem [thread:$0]  %s1, 256, %s29, [#allocation6], 64, 64, 4
    $region9: #{_dnn_forward_impl.1} parent=1 // pred_fallthru
      _
    // Predicated region
    $region10: #{_dnn_forward_impl.1} parent=1 // pred_check
      _
    $region11: #{_dnn_forward_impl.1} parent=1 // pred_check_branch
      %36 = sbr.rel (0) target = $region13
    $region12: #{_dnn_forward_impl.1} parent=1 // pred_region
      %s38 = ssub.s32 10240, 10240
      %39 = vsyncadd [#allocation6], %s38
      %s40 = sshll.u32 [#allocation7], 4
      %s41 = int_to_ptr.vmem [resolvable:$true] %s40
      %46 = dma.hbm_to_vmem [thread:$0]  %s2, 10240, %s41, [#allocation6], 64, 64, 4
    $region13: #{_dnn_forward_impl.1} parent=1 // pred_fallthru
      _
    // Predicated region
    $region14: #{_dnn_forward_impl.1} parent=1 // pred_check
      _
    $region15: #{_dnn_forward_impl.1} parent=1 // pred_check_branch
      %48 = sbr.rel (0) target = $region17
    $region16: #{_dnn_forward_impl.1} parent=1 // pred_region
      %s50 = ssub.s32 176, 176
      %51 = vsyncadd [#allocation9], %s50
      %s52 = sshll.u32 [#allocation8], 4
      %s53 = int_to_ptr.vmem [resolvable:$true] %s52
      %58 = dma.hbm_to_vmem [thread:$0]  %s3, 176, %s53, [#allocation9], 16, 16, 1
    $region17: #{_dnn_forward_impl.1} parent=1 // pred_fallthru
      _
    // Predicated region
    $region18: #{_dnn_forward_impl.1} parent=1 // pred_check
      _
    $region19: #{_dnn_forward_impl.1} parent=1 // pred_check_branch
      %60 = sbr.rel (0) target = $region21
    $region20: #{_dnn_forward_impl.1} parent=1 // pred_region
      %61 = dma.done [#allocation3], 32
    $region21: #{_dnn_forward_impl.1} parent=1 // pred_fallthru
      _
    // Predicated region
    $region22: #{_dnn_forward_impl.1} parent=1 // pred_check
      _
    $region23: #{_dnn_forward_impl.1} parent=1 // pred_check_branch
      %63 = sbr.rel (0) target = $region25
    $region24: #{_dnn_forward_impl.1} parent=1 // pred_region
      %64 = dma.done [#allocation6], 256
    $region25: #{_dnn_forward_impl.1} parent=1 // pred_fallthru
      _
    // Predicated region
    $region26: #{_dnn_forward_impl.1} parent=1 // pred_check
      _
    $region27: #{_dnn_forward_impl.1} parent=1 // pred_check_branch
      %66 = sbr.rel (0) target = $region29
    $region28: #{_dnn_forward_impl.1} parent=1 // pred_region
      %67 = dma.done [#allocation6], 10240
    $region29: #{_dnn_forward_impl.1} parent=1 // pred_fallthru
      _
    // Predicated region
    $region30: #{_dnn_forward_impl.1} parent=1 // pred_check
      _
    $region31: #{_dnn_forward_impl.1} parent=1 // pred_check_branch
      %69 = sbr.rel (0) target = $region33
    $region32: #{_dnn_forward_impl.1} parent=1 // pred_region
      %70 = dma.done [#allocation9], 176
    $region33: #{_dnn_forward_impl.1} parent=1 // pred_fallthru
      _
    %v72 = vld [vmem:[#allocation8] sm:$0x1]
    %v73 = vld [vmem:[#allocation8 + $0x1] sm:$0x1]
    %v74 = vld [vmem:[#allocation8 + $0x2] sm:$0x1]
    %v75 = vld [vmem:[#allocation8 + $0x3] sm:$0x1]
    %v76 = vld [vmem:[#allocation8 + $0x4] sm:$0x1]
    %v77 = vld [vmem:[#allocation8 + $0x5] sm:$0x1]
    %v78 = vld [vmem:[#allocation8 + $0x6] sm:$0x1]
    %v79 = vld [vmem:[#allocation8 + $0x7] sm:$0x1]
    %v80 = vld [vmem:[#allocation8 + $0x8] sm:$0x1]
    %v81 = vld [vmem:[#allocation8 + $0x9] sm:$0x1]
    %v82 = vld [vmem:[#allocation8 + $0xa] sm:$0x1]
    %v83 = vld [vmem:[#allocation2] sm:$0x3]
    %v84 = vpack.c.bf16 %v83, %v83
    %v85 = vld [vmem:[#allocation5] sm:$0xf]
    %v86 = vld [vmem:[#allocation5 + $0x4] sm:$0xf]
    %v87 = vld [vmem:[#allocation5 + $0x8] sm:$0xf]
    %v88 = vld [vmem:[#allocation5 + $0xc] sm:$0xf]
    %v90 = vlaneseq
    %v91 = vshrl.u32 %v90, 7
    %v92 = vsub.s32 0, %v91
    %v93 = vrot.slane %v72, %v92
    %v99 = vunpack.c.l.b16 %v85
    %v100 = vunpack.c.l.b16 %v86
    %v101 = vunpack.c.l.b16 %v87
    %v102 = vunpack.c.l.b16 %v88
    %v103 = vpack.c.b16 %v100, %v99
    %v104 = vpack.c.b16 %v102, %v101
    %vm107 = vcmask 261120
    %v109 = vsel %vm107, %v84, 0
    %111 = vmatprep.subr.bf16.mxu0 0
    %112 = vmatpush1.bf16.msra.mxu0 0
    %113 = vmatprep.subr.bf16.mxu0 0
    %114 = vmatpush1.bf16.msra.mxu0 0
    %115 = vmatprep.subr.bf16.mxu0 0
    %116 = vmatpush1.bf16.msra.mxu0 0
    %117 = vmatprep.subr.bf16.mxu0 0
    %118 = vmatpush1.bf16.msra.mxu0 0
    %119 = vmatprep.subr.bf16.mxu0 0
    %120 = vmatpush1.bf16.msra.mxu0 0
    %121 = vmatprep.subr.bf16.mxu0 0
    %122 = vmatpush1.bf16.msra.mxu0 0
    %123 = vmatprep.subr.bf16.mxu0 0
    %124 = vmatpush1.bf16.msra.mxu0 %v104
    %125 = vmatprep.subr.bf16.mxu0 0
    %126 = vmatpush1.bf16.msra.mxu0 %v103
    %127 = vmatprep.subr.bf16.mxu0 0
    %128 = vmatpush2.bf16.msra.mxu0 0
    %129 = vmatprep.subr.bf16.mxu0 0
    %130 = vmatpush2.bf16.msra.mxu0 0
    %131 = vmatprep.subr.bf16.mxu0 0
    %132 = vmatpush2.bf16.msra.mxu0 0
    %133 = vmatprep.subr.bf16.mxu0 0
    %134 = vmatpush2.bf16.msra.mxu0 0
    %135 = vmatprep.subr.bf16.mxu0 0
    %136 = vmatpush2.bf16.msra.mxu0 0
    %137 = vmatprep.subr.bf16.mxu0 0
    %138 = vmatpush2.bf16.msra.mxu0 0
    %139 = vmatprep.subr.bf16.mxu0 0
    %140 = vmatpush2.bf16.msra.mxu0 0
    %141 = vmatprep.subr.bf16.mxu0 0
    %142 = vmatpush2.bf16.msra.mxu0 0
    %143 = vmatprep.mubr.bf16.mxu0 0
    %144 = vmatmul.mubr.bf16.gmra.mxu0 %v109
    %v145 = vpop.f32.mrf.mxu0
    %v146 = vadd.f32 %v93, %v145
    %v147 = vpop.f32.mrf.mxu0
    %v148 = vpop.f32.mrf.mxu0
    %v149 = vpop.f32.mrf.mxu0
    %150 = vdwg.mxu0
    %v151 = vmax.f32 %v146, 0.0
    %v152 = vpack.c.bf16 %v151, %v151
    %v153 = vld [vmem:[#allocation7] sm:$0xf]
    %v154 = vld [vmem:[#allocation7 + $0x4] sm:$0xf]
    %v155 = vld [vmem:[#allocation7 + $0x8] sm:$0xf]
    %v156 = vld [vmem:[#allocation7 + $0xc] sm:$0xf]
    %v157 = vld [vmem:[#allocation7 + $0x10] sm:$0xf]
    %v158 = vld [vmem:[#allocation7 + $0x14] sm:$0xf]
    %v159 = vld [vmem:[#allocation7 + $0x18] sm:$0xf]
    %v160 = vld [vmem:[#allocation7 + $0x1c] sm:$0xf]
    %v161 = vld [vmem:[#allocation7 + $0x20] sm:$0xf]
    %v162 = vld [vmem:[#allocation7 + $0x24] sm:$0xf]
    %v163 = vld [vmem:[#allocation7 + $0x28] sm:$0xf]
    %v164 = vld [vmem:[#allocation7 + $0x2c] sm:$0xf]
    %v165 = vld [vmem:[#allocation7 + $0x30] sm:$0xf]
    %v166 = vld [vmem:[#allocation7 + $0x34] sm:$0xf]
    %v167 = vld [vmem:[#allocation7 + $0x38] sm:$0xf]
    %v168 = vld [vmem:[#allocation7 + $0x3c] sm:$0xf]
    %v170 = vlaneseq
    %v171 = vshrl.u32 %v170, 7
    %v172 = vsub.s32 0, %v171
    %v173 = vrot.slane %v73, %v172
    %v191 = vunpack.c.l.b16 %v153
    %v192 = vunpack.c.l.b16 %v154
    %v193 = vunpack.c.l.b16 %v155
    %v194 = vunpack.c.l.b16 %v156
    %v195 = vunpack.c.l.b16 %v157
    %v196 = vunpack.c.l.b16 %v158
    %v197 = vunpack.c.l.b16 %v159
    %v198 = vunpack.c.l.b16 %v160
    %v199 = vunpack.c.l.b16 %v161
    %v200 = vunpack.c.l.b16 %v162
    %v201 = vunpack.c.l.b16 %v163
    %v202 = vunpack.c.l.b16 %v164
    %v203 = vunpack.c.l.b16 %v165
    %v204 = vunpack.c.l.b16 %v166
    %v205 = vunpack.c.l.b16 %v167
    %v206 = vunpack.c.l.b16 %v168
    %v207 = vpack.c.b16 %v192, %v191
    %v208 = vpack.c.b16 %v194, %v193
    %v209 = vpack.c.b16 %v196, %v195
    %v210 = vpack.c.b16 %v198, %v197
    %v211 = vpack.c.b16 %v200, %v199
    %v212 = vpack.c.b16 %v202, %v201
    %v213 = vpack.c.b16 %v204, %v203
    %v214 = vpack.c.b16 %v206, %v205
    %223 = vmatprep.subr.bf16.mxu0 0
    %224 = vmatpush1.bf16.msra.mxu0 %v214
    %225 = vmatprep.subr.bf16.mxu0 0
    %226 = vmatpush1.bf16.msra.mxu0 %v213
    %227 = vmatprep.subr.bf16.mxu0 0
    %228 = vmatpush1.bf16.msra.mxu0 %v212
    %229 = vmatprep.subr.bf16.mxu0 0
    %230 = vmatpush1.bf16.msra.mxu0 %v211
    %231 = vmatprep.subr.bf16.mxu0 0
    %232 = vmatpush1.bf16.msra.mxu0 %v210
    %233 = vmatprep.subr.bf16.mxu0 0
    %234 = vmatpush1.bf16.msra.mxu0 %v209
    %235 = vmatprep.subr.bf16.mxu0 0
    %236 = vmatpush1.bf16.msra.mxu0 %v208
    %237 = vmatprep.subr.bf16.mxu0 0
    %238 = vmatpush1.bf16.msra.mxu0 %v207
    %239 = vmatprep.subr.bf16.mxu0 0
    %240 = vmatpush2.bf16.msra.mxu0 0
    %241 = vmatprep.subr.bf16.mxu0 0
    %242 = vmatpush2.bf16.msra.mxu0 0
    %243 = vmatprep.subr.bf16.mxu0 0
    %244 = vmatpush2.bf16.msra.mxu0 0
    %245 = vmatprep.subr.bf16.mxu0 0
    %246 = vmatpush2.bf16.msra.mxu0 0
    %247 = vmatprep.subr.bf16.mxu0 0
    %248 = vmatpush2.bf16.msra.mxu0 0
    %249 = vmatprep.subr.bf16.mxu0 0
    %250 = vmatpush2.bf16.msra.mxu0 0
    %251 = vmatprep.subr.bf16.mxu0 0
    %252 = vmatpush2.bf16.msra.mxu0 0
    %253 = vmatprep.subr.bf16.mxu0 0
    %254 = vmatpush2.bf16.msra.mxu0 0
    %255 = vmatprep.mubr.bf16.mxu0 0
    %256 = vmatmul.mubr.bf16.gmra.mxu0 %v152
    %v257 = vpop.f32.mrf.mxu0
    %v258 = vadd.f32 %v173, %v257
    %v259 = vpop.f32.mrf.mxu0
    %v260 = vpop.f32.mrf.mxu0
    %v261 = vpop.f32.mrf.mxu0
    %262 = vdwg.mxu0
    %v263 = vmax.f32 %v258, 0.0
    %v264 = vpack.c.bf16 %v263, %v263
    %s265 = scalar_lea.vmem [#allocation7], 64
    %v266 = vld [vmem:[%s265] sm:$0xf]
    %v267 = vld [vmem:[%s265 + $0x4] sm:$0xf]
    %v268 = vld [vmem:[%s265 + $0x8] sm:$0xf]
    %v269 = vld [vmem:[%s265 + $0xc] sm:$0xf]
    %v270 = vld [vmem:[%s265 + $0x10] sm:$0xf]
    %v271 = vld [vmem:[%s265 + $0x14] sm:$0xf]
    %v272 = vld [vmem:[%s265 + $0x18] sm:$0xf]
    %v273 = vld [vmem:[%s265 + $0x1c] sm:$0xf]
    %v274 = vld [vmem:[%s265 + $0x20] sm:$0xf]
    %v275 = vld [vmem:[%s265 + $0x24] sm:$0xf]
    %v276 = vld [vmem:[%s265 + $0x28] sm:$0xf]
    %v277 = vld [vmem:[%s265 + $0x2c] sm:$0xf]
    %v278 = vld [vmem:[%s265 + $0x30] sm:$0xf]
    %v279 = vld [vmem:[%s265 + $0x34] sm:$0xf]
    %v280 = vld [vmem:[%s265 + $0x38] sm:$0xf]
    %v281 = vld [vmem:[%s265 + $0x3c] sm:$0xf]
    %v283 = vlaneseq
    %v284 = vshrl.u32 %v283, 7
    %v285 = vsub.s32 0, %v284
    %v286 = vrot.slane %v74, %v285
    %v304 = vunpack.c.l.b16 %v266
    %v305 = vunpack.c.l.b16 %v267
    %v306 = vunpack.c.l.b16 %v268
    %v307 = vunpack.c.l.b16 %v269
    %v308 = vunpack.c.l.b16 %v270
    %v309 = vunpack.c.l.b16 %v271
    %v310 = vunpack.c.l.b16 %v272
    %v311 = vunpack.c.l.b16 %v273
    %v312 = vunpack.c.l.b16 %v274
    %v313 = vunpack.c.l.b16 %v275
    %v314 = vunpack.c.l.b16 %v276
    %v315 = vunpack.c.l.b16 %v277
    %v316 = vunpack.c.l.b16 %v278
    %v317 = vunpack.c.l.b16 %v279
    %v318 = vunpack.c.l.b16 %v280
    %v319 = vunpack.c.l.b16 %v281
    %v320 = vpack.c.b16 %v305, %v304
    %v321 = vpack.c.b16 %v307, %v306
    %v322 = vpack.c.b16 %v309, %v308
    %v323 = vpack.c.b16 %v311, %v310
    %v324 = vpack.c.b16 %v313, %v312
    %v325 = vpack.c.b16 %v315, %v314
    %v326 = vpack.c.b16 %v317, %v316
    %v327 = vpack.c.b16 %v319, %v318
    %336 = vmatprep.subr.bf16.mxu0 0
    %337 = vmatpush1.bf16.msra.mxu0 %v327
    %338 = vmatprep.subr.bf16.mxu0 0
    %339 = vmatpush1.bf16.msra.mxu0 %v326
    %340 = vmatprep.subr.bf16.mxu0 0
    %341 = vmatpush1.bf16.msra.mxu0 %v325
    %342 = vmatprep.subr.bf16.mxu0 0
    %343 = vmatpush1.bf16.msra.mxu0 %v324
    %344 = vmatprep.subr.bf16.mxu0 0
    %345 = vmatpush1.bf16.msra.mxu0 %v323
    %346 = vmatprep.subr.bf16.mxu0 0
    %347 = vmatpush1.bf16.msra.mxu0 %v322
    %348 = vmatprep.subr.bf16.mxu0 0
    %349 = vmatpush1.bf16.msra.mxu0 %v321
    %350 = vmatprep.subr.bf16.mxu0 0
    %351 = vmatpush1.bf16.msra.mxu0 %v320
    %352 = vmatprep.subr.bf16.mxu0 0
    %353 = vmatpush2.bf16.msra.mxu0 0
    %354 = vmatprep.subr.bf16.mxu0 0
    %355 = vmatpush2.bf16.msra.mxu0 0
    %356 = vmatprep.subr.bf16.mxu0 0
    %357 = vmatpush2.bf16.msra.mxu0 0
    %358 = vmatprep.subr.bf16.mxu0 0
    %359 = vmatpush2.bf16.msra.mxu0 0
    %360 = vmatprep.subr.bf16.mxu0 0
    %361 = vmatpush2.bf16.msra.mxu0 0
    %362 = vmatprep.subr.bf16.mxu0 0
    %363 = vmatpush2.bf16.msra.mxu0 0
    %364 = vmatprep.subr.bf16.mxu0 0
    %365 = vmatpush2.bf16.msra.mxu0 0
    %366 = vmatprep.subr.bf16.mxu0 0
    %367 = vmatpush2.bf16.msra.mxu0 0
    %368 = vmatprep.mubr.bf16.mxu0 0
    %369 = vmatmul.mubr.bf16.gmra.mxu0 %v264
    %v370 = vpop.f32.mrf.mxu0
    %v371 = vadd.f32 %v286, %v370
    %v372 = vpop.f32.mrf.mxu0
    %v373 = vpop.f32.mrf.mxu0
    %v374 = vpop.f32.mrf.mxu0
    %375 = vdwg.mxu0
    %v376 = vmax.f32 %v371, 0.0
    %v377 = vpack.c.bf16 %v376, %v376
    %s378 = scalar_lea.vmem [#allocation7], 128
    %v379 = vld [vmem:[%s378] sm:$0xf]
    %v380 = vld [vmem:[%s378 + $0x4] sm:$0xf]
    %v381 = vld [vmem:[%s378 + $0x8] sm:$0xf]
    %v382 = vld [vmem:[%s378 + $0xc] sm:$0xf]
    %v383 = vld [vmem:[%s378 + $0x10] sm:$0xf]
    %v384 = vld [vmem:[%s378 + $0x14] sm:$0xf]
    %v385 = vld [vmem:[%s378 + $0x18] sm:$0xf]
    %v386 = vld [vmem:[%s378 + $0x1c] sm:$0xf]
    %v387 = vld [vmem:[%s378 + $0x20] sm:$0xf]
    %v388 = vld [vmem:[%s378 + $0x24] sm:$0xf]
    %v389 = vld [vmem:[%s378 + $0x28] sm:$0xf]
    %v390 = vld [vmem:[%s378 + $0x2c] sm:$0xf]
    %v391 = vld [vmem:[%s378 + $0x30] sm:$0xf]
    %v392 = vld [vmem:[%s378 + $0x34] sm:$0xf]
    %v393 = vld [vmem:[%s378 + $0x38] sm:$0xf]
    %v394 = vld [vmem:[%s378 + $0x3c] sm:$0xf]
    %v396 = vlaneseq
    %v397 = vshrl.u32 %v396, 7
    %v398 = vsub.s32 0, %v397
    %v399 = vrot.slane %v75, %v398
    %v417 = vunpack.c.l.b16 %v379
    %v418 = vunpack.c.l.b16 %v380
    %v419 = vunpack.c.l.b16 %v381
    %v420 = vunpack.c.l.b16 %v382
    %v421 = vunpack.c.l.b16 %v383
    %v422 = vunpack.c.l.b16 %v384
    %v423 = vunpack.c.l.b16 %v385
    %v424 = vunpack.c.l.b16 %v386
    %v425 = vunpack.c.l.b16 %v387
    %v426 = vunpack.c.l.b16 %v388
    %v427 = vunpack.c.l.b16 %v389
    %v428 = vunpack.c.l.b16 %v390
    %v429 = vunpack.c.l.b16 %v391
    %v430 = vunpack.c.l.b16 %v392
    %v431 = vunpack.c.l.b16 %v393
    %v432 = vunpack.c.l.b16 %v394
    %v433 = vpack.c.b16 %v418, %v417
    %v434 = vpack.c.b16 %v420, %v419
    %v435 = vpack.c.b16 %v422, %v421
    %v436 = vpack.c.b16 %v424, %v423
    %v437 = vpack.c.b16 %v426, %v425
    %v438 = vpack.c.b16 %v428, %v427
    %v439 = vpack.c.b16 %v430, %v429
    %v440 = vpack.c.b16 %v432, %v431
    %449 = vmatprep.subr.bf16.mxu0 0
    %450 = vmatpush1.bf16.msra.mxu0 %v440
    %451 = vmatprep.subr.bf16.mxu0 0
    %452 = vmatpush1.bf16.msra.mxu0 %v439
    %453 = vmatprep.subr.bf16.mxu0 0
    %454 = vmatpush1.bf16.msra.mxu0 %v438
    %455 = vmatprep.subr.bf16.mxu0 0
    %456 = vmatpush1.bf16.msra.mxu0 %v437
    %457 = vmatprep.subr.bf16.mxu0 0
    %458 = vmatpush1.bf16.msra.mxu0 %v436
    %459 = vmatprep.subr.bf16.mxu0 0
    %460 = vmatpush1.bf16.msra.mxu0 %v435
    %461 = vmatprep.subr.bf16.mxu0 0
    %462 = vmatpush1.bf16.msra.mxu0 %v434
    %463 = vmatprep.subr.bf16.mxu0 0
    %464 = vmatpush1.bf16.msra.mxu0 %v433
    %465 = vmatprep.subr.bf16.mxu0 0
    %466 = vmatpush2.bf16.msra.mxu0 0
    %467 = vmatprep.subr.bf16.mxu0 0
    %468 = vmatpush2.bf16.msra.mxu0 0
    %469 = vmatprep.subr.bf16.mxu0 0
    %470 = vmatpush2.bf16.msra.mxu0 0
    %471 = vmatprep.subr.bf16.mxu0 0
    %472 = vmatpush2.bf16.msra.mxu0 0
    %473 = vmatprep.subr.bf16.mxu0 0
    %474 = vmatpush2.bf16.msra.mxu0 0
    %475 = vmatprep.subr.bf16.mxu0 0
    %476 = vmatpush2.bf16.msra.mxu0 0
    %477 = vmatprep.subr.bf16.mxu0 0
    %478 = vmatpush2.bf16.msra.mxu0 0
    %479 = vmatprep.subr.bf16.mxu0 0
    %480 = vmatpush2.bf16.msra.mxu0 0
    %481 = vmatprep.mubr.bf16.mxu0 0
    %482 = vmatmul.mubr.bf16.gmra.mxu0 %v377
    %v483 = vpop.f32.mrf.mxu0
    %v484 = vadd.f32 %v399, %v483
    %v485 = vpop.f32.mrf.mxu0
    %v486 = vpop.f32.mrf.mxu0
    %v487 = vpop.f32.mrf.mxu0
    %488 = vdwg.mxu0
    %v489 = vmax.f32 %v484, 0.0
    %v490 = vpack.c.bf16 %v489, %v489
    %s491 = scalar_lea.vmem [#allocation7], 192
    %v492 = vld [vmem:[%s491] sm:$0xf]
    %v493 = vld [vmem:[%s491 + $0x4] sm:$0xf]
    %v494 = vld [vmem:[%s491 + $0x8] sm:$0xf]
    %v495 = vld [vmem:[%s491 + $0xc] sm:$0xf]
    %v496 = vld [vmem:[%s491 + $0x10] sm:$0xf]
    %v497 = vld [vmem:[%s491 + $0x14] sm:$0xf]
    %v498 = vld [vmem:[%s491 + $0x18] sm:$0xf]
    %v499 = vld [vmem:[%s491 + $0x1c] sm:$0xf]
    %v500 = vld [vmem:[%s491 + $0x20] sm:$0xf]
    %v501 = vld [vmem:[%s491 + $0x24] sm:$0xf]
    %v502 = vld [vmem:[%s491 + $0x28] sm:$0xf]
    %v503 = vld [vmem:[%s491 + $0x2c] sm:$0xf]
    %v504 = vld [vmem:[%s491 + $0x30] sm:$0xf]
    %v505 = vld [vmem:[%s491 + $0x34] sm:$0xf]
    %v506 = vld [vmem:[%s491 + $0x38] sm:$0xf]
    %v507 = vld [vmem:[%s491 + $0x3c] sm:$0xf]
    %v509 = vlaneseq
    %v510 = vshrl.u32 %v509, 7
    %v511 = vsub.s32 0, %v510
    %v512 = vrot.slane %v76, %v511
    %v530 = vunpack.c.l.b16 %v492
    %v531 = vunpack.c.l.b16 %v493
    %v532 = vunpack.c.l.b16 %v494
    %v533 = vunpack.c.l.b16 %v495
    %v534 = vunpack.c.l.b16 %v496
    %v535 = vunpack.c.l.b16 %v497
    %v536 = vunpack.c.l.b16 %v498
    %v537 = vunpack.c.l.b16 %v499
    %v538 = vunpack.c.l.b16 %v500
    %v539 = vunpack.c.l.b16 %v501
    %v540 = vunpack.c.l.b16 %v502
    %v541 = vunpack.c.l.b16 %v503
    %v542 = vunpack.c.l.b16 %v504
    %v543 = vunpack.c.l.b16 %v505
    %v544 = vunpack.c.l.b16 %v506
    %v545 = vunpack.c.l.b16 %v507
    %v546 = vpack.c.b16 %v531, %v530
    %v547 = vpack.c.b16 %v533, %v532
    %v548 = vpack.c.b16 %v535, %v534
    %v549 = vpack.c.b16 %v537, %v536
    %v550 = vpack.c.b16 %v539, %v538
    %v551 = vpack.c.b16 %v541, %v540
    %v552 = vpack.c.b16 %v543, %v542
    %v553 = vpack.c.b16 %v545, %v544
    %562 = vmatprep.subr.bf16.mxu0 0
    %563 = vmatpush1.bf16.msra.mxu0 %v553
    %564 = vmatprep.subr.bf16.mxu0 0
    %565 = vmatpush1.bf16.msra.mxu0 %v552
    %566 = vmatprep.subr.bf16.mxu0 0
    %567 = vmatpush1.bf16.msra.mxu0 %v551
    %568 = vmatprep.subr.bf16.mxu0 0
    %569 = vmatpush1.bf16.msra.mxu0 %v550
    %570 = vmatprep.subr.bf16.mxu0 0
    %571 = vmatpush1.bf16.msra.mxu0 %v549
    %572 = vmatprep.subr.bf16.mxu0 0
    %573 = vmatpush1.bf16.msra.mxu0 %v548
    %574 = vmatprep.subr.bf16.mxu0 0
    %575 = vmatpush1.bf16.msra.mxu0 %v547
    %576 = vmatprep.subr.bf16.mxu0 0
    %577 = vmatpush1.bf16.msra.mxu0 %v546
    %578 = vmatprep.subr.bf16.mxu0 0
    %579 = vmatpush2.bf16.msra.mxu0 0
    %580 = vmatprep.subr.bf16.mxu0 0
    %581 = vmatpush2.bf16.msra.mxu0 0
    %582 = vmatprep.subr.bf16.mxu0 0
    %583 = vmatpush2.bf16.msra.mxu0 0
    %584 = vmatprep.subr.bf16.mxu0 0
    %585 = vmatpush2.bf16.msra.mxu0 0
    %586 = vmatprep.subr.bf16.mxu0 0
    %587 = vmatpush2.bf16.msra.mxu0 0
    %588 = vmatprep.subr.bf16.mxu0 0
    %589 = vmatpush2.bf16.msra.mxu0 0
    %590 = vmatprep.subr.bf16.mxu0 0
    %591 = vmatpush2.bf16.msra.mxu0 0
    %592 = vmatprep.subr.bf16.mxu0 0
    %593 = vmatpush2.bf16.msra.mxu0 0
    %594 = vmatprep.mubr.bf16.mxu0 0
    %595 = vmatmul.mubr.bf16.gmra.mxu0 %v490
    %v596 = vpop.f32.mrf.mxu0
    %v597 = vadd.f32 %v512, %v596
    %v598 = vpop.f32.mrf.mxu0
    %v599 = vpop.f32.mrf.mxu0
    %v600 = vpop.f32.mrf.mxu0
    %601 = vdwg.mxu0
    %v602 = vmax.f32 %v597, 0.0
    %v603 = vpack.c.bf16 %v602, %v602
    %s604 = scalar_lea.vmem [#allocation7], 256
    %v605 = vld [vmem:[%s604] sm:$0xf]
    %v606 = vld [vmem:[%s604 + $0x4] sm:$0xf]
    %v607 = vld [vmem:[%s604 + $0x8] sm:$0xf]
    %v608 = vld [vmem:[%s604 + $0xc] sm:$0xf]
    %v609 = vld [vmem:[%s604 + $0x10] sm:$0xf]
    %v610 = vld [vmem:[%s604 + $0x14] sm:$0xf]
    %v611 = vld [vmem:[%s604 + $0x18] sm:$0xf]
    %v612 = vld [vmem:[%s604 + $0x1c] sm:$0xf]
    %v613 = vld [vmem:[%s604 + $0x20] sm:$0xf]
    %v614 = vld [vmem:[%s604 + $0x24] sm:$0xf]
    %v615 = vld [vmem:[%s604 + $0x28] sm:$0xf]
    %v616 = vld [vmem:[%s604 + $0x2c] sm:$0xf]
    %v617 = vld [vmem:[%s604 + $0x30] sm:$0xf]
    %v618 = vld [vmem:[%s604 + $0x34] sm:$0xf]
    %v619 = vld [vmem:[%s604 + $0x38] sm:$0xf]
    %v620 = vld [vmem:[%s604 + $0x3c] sm:$0xf]
    %v622 = vlaneseq
    %v623 = vshrl.u32 %v622, 7
    %v624 = vsub.s32 0, %v623
    %v625 = vrot.slane %v77, %v624
    %v643 = vunpack.c.l.b16 %v605
    %v644 = vunpack.c.l.b16 %v606
    %v645 = vunpack.c.l.b16 %v607
    %v646 = vunpack.c.l.b16 %v608
    %v647 = vunpack.c.l.b16 %v609
    %v648 = vunpack.c.l.b16 %v610
    %v649 = vunpack.c.l.b16 %v611
    %v650 = vunpack.c.l.b16 %v612
    %v651 = vunpack.c.l.b16 %v613
    %v652 = vunpack.c.l.b16 %v614
    %v653 = vunpack.c.l.b16 %v615
    %v654 = vunpack.c.l.b16 %v616
    %v655 = vunpack.c.l.b16 %v617
    %v656 = vunpack.c.l.b16 %v618
    %v657 = vunpack.c.l.b16 %v619
    %v658 = vunpack.c.l.b16 %v620
    %v659 = vpack.c.b16 %v644, %v643
    %v660 = vpack.c.b16 %v646, %v645
    %v661 = vpack.c.b16 %v648, %v647
    %v662 = vpack.c.b16 %v650, %v649
    %v663 = vpack.c.b16 %v652, %v651
    %v664 = vpack.c.b16 %v654, %v653
    %v665 = vpack.c.b16 %v656, %v655
    %v666 = vpack.c.b16 %v658, %v657
    %675 = vmatprep.subr.bf16.mxu0 0
    %676 = vmatpush1.bf16.msra.mxu0 %v666
    %677 = vmatprep.subr.bf16.mxu0 0
    %678 = vmatpush1.bf16.msra.mxu0 %v665
    %679 = vmatprep.subr.bf16.mxu0 0
    %680 = vmatpush1.bf16.msra.mxu0 %v664
    %681 = vmatprep.subr.bf16.mxu0 0
    %682 = vmatpush1.bf16.msra.mxu0 %v663
    %683 = vmatprep.subr.bf16.mxu0 0
    %684 = vmatpush1.bf16.msra.mxu0 %v662
    %685 = vmatprep.subr.bf16.mxu0 0
    %686 = vmatpush1.bf16.msra.mxu0 %v661
    %687 = vmatprep.subr.bf16.mxu0 0
    %688 = vmatpush1.bf16.msra.mxu0 %v660
    %689 = vmatprep.subr.bf16.mxu0 0
    %690 = vmatpush1.bf16.msra.mxu0 %v659
    %691 = vmatprep.subr.bf16.mxu0 0
    %692 = vmatpush2.bf16.msra.mxu0 0
    %693 = vmatprep.subr.bf16.mxu0 0
    %694 = vmatpush2.bf16.msra.mxu0 0
    %695 = vmatprep.subr.bf16.mxu0 0
    %696 = vmatpush2.bf16.msra.mxu0 0
    %697 = vmatprep.subr.bf16.mxu0 0
    %698 = vmatpush2.bf16.msra.mxu0 0
    %699 = vmatprep.subr.bf16.mxu0 0
    %700 = vmatpush2.bf16.msra.mxu0 0
    %701 = vmatprep.subr.bf16.mxu0 0
    %702 = vmatpush2.bf16.msra.mxu0 0
    %703 = vmatprep.subr.bf16.mxu0 0
    %704 = vmatpush2.bf16.msra.mxu0 0
    %705 = vmatprep.subr.bf16.mxu0 0
    %706 = vmatpush2.bf16.msra.mxu0 0
    %707 = vmatprep.mubr.bf16.mxu0 0
    %708 = vmatmul.mubr.bf16.gmra.mxu0 %v603
    %v709 = vpop.f32.mrf.mxu0
    %v710 = vadd.f32 %v625, %v709
    %v711 = vpop.f32.mrf.mxu0
    %v712 = vpop.f32.mrf.mxu0
    %v713 = vpop.f32.mrf.mxu0
    %714 = vdwg.mxu0
    %v715 = vmax.f32 %v710, 0.0
    %v716 = vpack.c.bf16 %v715, %v715
    %s717 = scalar_lea.vmem [#allocation7], 320
    %v718 = vld [vmem:[%s717] sm:$0xf]
    %v719 = vld [vmem:[%s717 + $0x4] sm:$0xf]
    %v720 = vld [vmem:[%s717 + $0x8] sm:$0xf]
    %v721 = vld [vmem:[%s717 + $0xc] sm:$0xf]
    %v722 = vld [vmem:[%s717 + $0x10] sm:$0xf]
    %v723 = vld [vmem:[%s717 + $0x14] sm:$0xf]
    %v724 = vld [vmem:[%s717 + $0x18] sm:$0xf]
    %v725 = vld [vmem:[%s717 + $0x1c] sm:$0xf]
    %v726 = vld [vmem:[%s717 + $0x20] sm:$0xf]
    %v727 = vld [vmem:[%s717 + $0x24] sm:$0xf]
    %v728 = vld [vmem:[%s717 + $0x28] sm:$0xf]
    %v729 = vld [vmem:[%s717 + $0x2c] sm:$0xf]
    %v730 = vld [vmem:[%s717 + $0x30] sm:$0xf]
    %v731 = vld [vmem:[%s717 + $0x34] sm:$0xf]
    %v732 = vld [vmem:[%s717 + $0x38] sm:$0xf]
    %v733 = vld [vmem:[%s717 + $0x3c] sm:$0xf]
    %v735 = vlaneseq
    %v736 = vshrl.u32 %v735, 7
    %v737 = vsub.s32 0, %v736
    %v738 = vrot.slane %v78, %v737
    %v756 = vunpack.c.l.b16 %v718
    %v757 = vunpack.c.l.b16 %v719
    %v758 = vunpack.c.l.b16 %v720
    %v759 = vunpack.c.l.b16 %v721
    %v760 = vunpack.c.l.b16 %v722
    %v761 = vunpack.c.l.b16 %v723
    %v762 = vunpack.c.l.b16 %v724
    %v763 = vunpack.c.l.b16 %v725
    %v764 = vunpack.c.l.b16 %v726
    %v765 = vunpack.c.l.b16 %v727
    %v766 = vunpack.c.l.b16 %v728
    %v767 = vunpack.c.l.b16 %v729
    %v768 = vunpack.c.l.b16 %v730
    %v769 = vunpack.c.l.b16 %v731
    %v770 = vunpack.c.l.b16 %v732
    %v771 = vunpack.c.l.b16 %v733
    %v772 = vpack.c.b16 %v757, %v756
    %v773 = vpack.c.b16 %v759, %v758
    %v774 = vpack.c.b16 %v761, %v760
    %v775 = vpack.c.b16 %v763, %v762
    %v776 = vpack.c.b16 %v765, %v764
    %v777 = vpack.c.b16 %v767, %v766
    %v778 = vpack.c.b16 %v769, %v768
    %v779 = vpack.c.b16 %v771, %v770
    %788 = vmatprep.subr.bf16.mxu0 0
    %789 = vmatpush1.bf16.msra.mxu0 %v779
    %790 = vmatprep.subr.bf16.mxu0 0
    %791 = vmatpush1.bf16.msra.mxu0 %v778
    %792 = vmatprep.subr.bf16.mxu0 0
    %793 = vmatpush1.bf16.msra.mxu0 %v777
    %794 = vmatprep.subr.bf16.mxu0 0
    %795 = vmatpush1.bf16.msra.mxu0 %v776
    %796 = vmatprep.subr.bf16.mxu0 0
    %797 = vmatpush1.bf16.msra.mxu0 %v775
    %798 = vmatprep.subr.bf16.mxu0 0
    %799 = vmatpush1.bf16.msra.mxu0 %v774
    %800 = vmatprep.subr.bf16.mxu0 0
    %801 = vmatpush1.bf16.msra.mxu0 %v773
    %802 = vmatprep.subr.bf16.mxu0 0
    %803 = vmatpush1.bf16.msra.mxu0 %v772
    %804 = vmatprep.subr.bf16.mxu0 0
    %805 = vmatpush2.bf16.msra.mxu0 0
    %806 = vmatprep.subr.bf16.mxu0 0
    %807 = vmatpush2.bf16.msra.mxu0 0
    %808 = vmatprep.subr.bf16.mxu0 0
    %809 = vmatpush2.bf16.msra.mxu0 0
    %810 = vmatprep.subr.bf16.mxu0 0
    %811 = vmatpush2.bf16.msra.mxu0 0
    %812 = vmatprep.subr.bf16.mxu0 0
    %813 = vmatpush2.bf16.msra.mxu0 0
    %814 = vmatprep.subr.bf16.mxu0 0
    %815 = vmatpush2.bf16.msra.mxu0 0
    %816 = vmatprep.subr.bf16.mxu0 0
    %817 = vmatpush2.bf16.msra.mxu0 0
    %818 = vmatprep.subr.bf16.mxu0 0
    %819 = vmatpush2.bf16.msra.mxu0 0
    %820 = vmatprep.mubr.bf16.mxu0 0
    %821 = vmatmul.mubr.bf16.gmra.mxu0 %v716
    %v822 = vpop.f32.mrf.mxu0
    %v823 = vadd.f32 %v738, %v822
    %v824 = vpop.f32.mrf.mxu0
    %v825 = vpop.f32.mrf.mxu0
    %v826 = vpop.f32.mrf.mxu0
    %827 = vdwg.mxu0
    %v828 = vmax.f32 %v823, 0.0
    %v829 = vpack.c.bf16 %v828, %v828
    %s830 = scalar_lea.vmem [#allocation7], 384
    %v831 = vld [vmem:[%s830] sm:$0xf]
    %v832 = vld [vmem:[%s830 + $0x4] sm:$0xf]
    %v833 = vld [vmem:[%s830 + $0x8] sm:$0xf]
    %v834 = vld [vmem:[%s830 + $0xc] sm:$0xf]
    %v835 = vld [vmem:[%s830 + $0x10] sm:$0xf]
    %v836 = vld [vmem:[%s830 + $0x14] sm:$0xf]
    %v837 = vld [vmem:[%s830 + $0x18] sm:$0xf]
    %v838 = vld [vmem:[%s830 + $0x1c] sm:$0xf]
    %v839 = vld [vmem:[%s830 + $0x20] sm:$0xf]
    %v840 = vld [vmem:[%s830 + $0x24] sm:$0xf]
    %v841 = vld [vmem:[%s830 + $0x28] sm:$0xf]
    %v842 = vld [vmem:[%s830 + $0x2c] sm:$0xf]
    %v843 = vld [vmem:[%s830 + $0x30] sm:$0xf]
    %v844 = vld [vmem:[%s830 + $0x34] sm:$0xf]
    %v845 = vld [vmem:[%s830 + $0x38] sm:$0xf]
    %v846 = vld [vmem:[%s830 + $0x3c] sm:$0xf]
    %v848 = vlaneseq
    %v849 = vshrl.u32 %v848, 7
    %v850 = vsub.s32 0, %v849
    %v851 = vrot.slane %v79, %v850
    %v869 = vunpack.c.l.b16 %v831
    %v870 = vunpack.c.l.b16 %v832
    %v871 = vunpack.c.l.b16 %v833
    %v872 = vunpack.c.l.b16 %v834
    %v873 = vunpack.c.l.b16 %v835
    %v874 = vunpack.c.l.b16 %v836
    %v875 = vunpack.c.l.b16 %v837
    %v876 = vunpack.c.l.b16 %v838
    %v877 = vunpack.c.l.b16 %v839
    %v878 = vunpack.c.l.b16 %v840
    %v879 = vunpack.c.l.b16 %v841
    %v880 = vunpack.c.l.b16 %v842
    %v881 = vunpack.c.l.b16 %v843
    %v882 = vunpack.c.l.b16 %v844
    %v883 = vunpack.c.l.b16 %v845
    %v884 = vunpack.c.l.b16 %v846
    %v885 = vpack.c.b16 %v870, %v869
    %v886 = vpack.c.b16 %v872, %v871
    %v887 = vpack.c.b16 %v874, %v873
    %v888 = vpack.c.b16 %v876, %v875
    %v889 = vpack.c.b16 %v878, %v877
    %v890 = vpack.c.b16 %v880, %v879
    %v891 = vpack.c.b16 %v882, %v881
    %v892 = vpack.c.b16 %v884, %v883
    %901 = vmatprep.subr.bf16.mxu0 0
    %902 = vmatpush1.bf16.msra.mxu0 %v892
    %903 = vmatprep.subr.bf16.mxu0 0
    %904 = vmatpush1.bf16.msra.mxu0 %v891
    %905 = vmatprep.subr.bf16.mxu0 0
    %906 = vmatpush1.bf16.msra.mxu0 %v890
    %907 = vmatprep.subr.bf16.mxu0 0
    %908 = vmatpush1.bf16.msra.mxu0 %v889
    %909 = vmatprep.subr.bf16.mxu0 0
    %910 = vmatpush1.bf16.msra.mxu0 %v888
    %911 = vmatprep.subr.bf16.mxu0 0
    %912 = vmatpush1.bf16.msra.mxu0 %v887
    %913 = vmatprep.subr.bf16.mxu0 0
    %914 = vmatpush1.bf16.msra.mxu0 %v886
    %915 = vmatprep.subr.bf16.mxu0 0
    %916 = vmatpush1.bf16.msra.mxu0 %v885
    %917 = vmatprep.subr.bf16.mxu0 0
    %918 = vmatpush2.bf16.msra.mxu0 0
    %919 = vmatprep.subr.bf16.mxu0 0
    %920 = vmatpush2.bf16.msra.mxu0 0
    %921 = vmatprep.subr.bf16.mxu0 0
    %922 = vmatpush2.bf16.msra.mxu0 0
    %923 = vmatprep.subr.bf16.mxu0 0
    %924 = vmatpush2.bf16.msra.mxu0 0
    %925 = vmatprep.subr.bf16.mxu0 0
    %926 = vmatpush2.bf16.msra.mxu0 0
    %927 = vmatprep.subr.bf16.mxu0 0
    %928 = vmatpush2.bf16.msra.mxu0 0
    %929 = vmatprep.subr.bf16.mxu0 0
    %930 = vmatpush2.bf16.msra.mxu0 0
    %931 = vmatprep.subr.bf16.mxu0 0
    %932 = vmatpush2.bf16.msra.mxu0 0
    %933 = vmatprep.mubr.bf16.mxu0 0
    %934 = vmatmul.mubr.bf16.gmra.mxu0 %v829
    %v935 = vpop.f32.mrf.mxu0
    %v936 = vadd.f32 %v851, %v935
    %v937 = vpop.f32.mrf.mxu0
    %v938 = vpop.f32.mrf.mxu0
    %v939 = vpop.f32.mrf.mxu0
    %940 = vdwg.mxu0
    %v941 = vmax.f32 %v936, 0.0
    %v942 = vpack.c.bf16 %v941, %v941
    %s943 = scalar_lea.vmem [#allocation7], 448
    %v944 = vld [vmem:[%s943] sm:$0xf]
    %v945 = vld [vmem:[%s943 + $0x4] sm:$0xf]
    %v946 = vld [vmem:[%s943 + $0x8] sm:$0xf]
    %v947 = vld [vmem:[%s943 + $0xc] sm:$0xf]
    %v948 = vld [vmem:[%s943 + $0x10] sm:$0xf]
    %v949 = vld [vmem:[%s943 + $0x14] sm:$0xf]
    %v950 = vld [vmem:[%s943 + $0x18] sm:$0xf]
    %v951 = vld [vmem:[%s943 + $0x1c] sm:$0xf]
    %v952 = vld [vmem:[%s943 + $0x20] sm:$0xf]
    %v953 = vld [vmem:[%s943 + $0x24] sm:$0xf]
    %v954 = vld [vmem:[%s943 + $0x28] sm:$0xf]
    %v955 = vld [vmem:[%s943 + $0x2c] sm:$0xf]
    %v956 = vld [vmem:[%s943 + $0x30] sm:$0xf]
    %v957 = vld [vmem:[%s943 + $0x34] sm:$0xf]
    %v958 = vld [vmem:[%s943 + $0x38] sm:$0xf]
    %v959 = vld [vmem:[%s943 + $0x3c] sm:$0xf]
    %v961 = vlaneseq
    %v962 = vshrl.u32 %v961, 7
    %v963 = vsub.s32 0, %v962
    %v964 = vrot.slane %v80, %v963
    %v982 = vunpack.c.l.b16 %v944
    %v983 = vunpack.c.l.b16 %v945
    %v984 = vunpack.c.l.b16 %v946
    %v985 = vunpack.c.l.b16 %v947
    %v986 = vunpack.c.l.b16 %v948
    %v987 = vunpack.c.l.b16 %v949
    %v988 = vunpack.c.l.b16 %v950
    %v989 = vunpack.c.l.b16 %v951
    %v990 = vunpack.c.l.b16 %v952
    %v991 = vunpack.c.l.b16 %v953
    %v992 = vunpack.c.l.b16 %v954
    %v993 = vunpack.c.l.b16 %v955
    %v994 = vunpack.c.l.b16 %v956
    %v995 = vunpack.c.l.b16 %v957
    %v996 = vunpack.c.l.b16 %v958
    %v997 = vunpack.c.l.b16 %v959
    %v998 = vpack.c.b16 %v983, %v982
    %v999 = vpack.c.b16 %v985, %v984
    %v1000 = vpack.c.b16 %v987, %v986
    %v1001 = vpack.c.b16 %v989, %v988
    %v1002 = vpack.c.b16 %v991, %v990
    %v1003 = vpack.c.b16 %v993, %v992
    %v1004 = vpack.c.b16 %v995, %v994
    %v1005 = vpack.c.b16 %v997, %v996
    %1014 = vmatprep.subr.bf16.mxu0 0
    %1015 = vmatpush1.bf16.msra.mxu0 %v1005
    %1016 = vmatprep.subr.bf16.mxu0 0
    %1017 = vmatpush1.bf16.msra.mxu0 %v1004
    %1018 = vmatprep.subr.bf16.mxu0 0
    %1019 = vmatpush1.bf16.msra.mxu0 %v1003
    %1020 = vmatprep.subr.bf16.mxu0 0
    %1021 = vmatpush1.bf16.msra.mxu0 %v1002
    %1022 = vmatprep.subr.bf16.mxu0 0
    %1023 = vmatpush1.bf16.msra.mxu0 %v1001
    %1024 = vmatprep.subr.bf16.mxu0 0
    %1025 = vmatpush1.bf16.msra.mxu0 %v1000
    %1026 = vmatprep.subr.bf16.mxu0 0
    %1027 = vmatpush1.bf16.msra.mxu0 %v999
    %1028 = vmatprep.subr.bf16.mxu0 0
    %1029 = vmatpush1.bf16.msra.mxu0 %v998
    %1030 = vmatprep.subr.bf16.mxu0 0
    %1031 = vmatpush2.bf16.msra.mxu0 0
    %1032 = vmatprep.subr.bf16.mxu0 0
    %1033 = vmatpush2.bf16.msra.mxu0 0
    %1034 = vmatprep.subr.bf16.mxu0 0
    %1035 = vmatpush2.bf16.msra.mxu0 0
    %1036 = vmatprep.subr.bf16.mxu0 0
    %1037 = vmatpush2.bf16.msra.mxu0 0
    %1038 = vmatprep.subr.bf16.mxu0 0
    %1039 = vmatpush2.bf16.msra.mxu0 0
    %1040 = vmatprep.subr.bf16.mxu0 0
    %1041 = vmatpush2.bf16.msra.mxu0 0
    %1042 = vmatprep.subr.bf16.mxu0 0
    %1043 = vmatpush2.bf16.msra.mxu0 0
    %1044 = vmatprep.subr.bf16.mxu0 0
    %1045 = vmatpush2.bf16.msra.mxu0 0
    %1046 = vmatprep.mubr.bf16.mxu0 0
    %1047 = vmatmul.mubr.bf16.gmra.mxu0 %v942
    %v1048 = vpop.f32.mrf.mxu0
    %v1049 = vadd.f32 %v964, %v1048
    %v1050 = vpop.f32.mrf.mxu0
    %v1051 = vpop.f32.mrf.mxu0
    %v1052 = vpop.f32.mrf.mxu0
    %1053 = vdwg.mxu0
    %v1054 = vmax.f32 %v1049, 0.0
    %v1055 = vpack.c.bf16 %v1054, %v1054
    %s1056 = scalar_lea.vmem [#allocation7], 512
    %v1057 = vld [vmem:[%s1056] sm:$0xf]
    %v1058 = vld [vmem:[%s1056 + $0x4] sm:$0xf]
    %v1059 = vld [vmem:[%s1056 + $0x8] sm:$0xf]
    %v1060 = vld [vmem:[%s1056 + $0xc] sm:$0xf]
    %v1061 = vld [vmem:[%s1056 + $0x10] sm:$0xf]
    %v1062 = vld [vmem:[%s1056 + $0x14] sm:$0xf]
    %v1063 = vld [vmem:[%s1056 + $0x18] sm:$0xf]
    %v1064 = vld [vmem:[%s1056 + $0x1c] sm:$0xf]
    %v1065 = vld [vmem:[%s1056 + $0x20] sm:$0xf]
    %v1066 = vld [vmem:[%s1056 + $0x24] sm:$0xf]
    %v1067 = vld [vmem:[%s1056 + $0x28] sm:$0xf]
    %v1068 = vld [vmem:[%s1056 + $0x2c] sm:$0xf]
    %v1069 = vld [vmem:[%s1056 + $0x30] sm:$0xf]
    %v1070 = vld [vmem:[%s1056 + $0x34] sm:$0xf]
    %v1071 = vld [vmem:[%s1056 + $0x38] sm:$0xf]
    %v1072 = vld [vmem:[%s1056 + $0x3c] sm:$0xf]
    %v1074 = vlaneseq
    %v1075 = vshrl.u32 %v1074, 7
    %v1076 = vsub.s32 0, %v1075
    %v1077 = vrot.slane %v81, %v1076
    %v1095 = vunpack.c.l.b16 %v1057
    %v1096 = vunpack.c.l.b16 %v1058
    %v1097 = vunpack.c.l.b16 %v1059
    %v1098 = vunpack.c.l.b16 %v1060
    %v1099 = vunpack.c.l.b16 %v1061
    %v1100 = vunpack.c.l.b16 %v1062
    %v1101 = vunpack.c.l.b16 %v1063
    %v1102 = vunpack.c.l.b16 %v1064
    %v1103 = vunpack.c.l.b16 %v1065
    %v1104 = vunpack.c.l.b16 %v1066
    %v1105 = vunpack.c.l.b16 %v1067
    %v1106 = vunpack.c.l.b16 %v1068
    %v1107 = vunpack.c.l.b16 %v1069
    %v1108 = vunpack.c.l.b16 %v1070
    %v1109 = vunpack.c.l.b16 %v1071
    %v1110 = vunpack.c.l.b16 %v1072
    %v1111 = vpack.c.b16 %v1096, %v1095
    %v1112 = vpack.c.b16 %v1098, %v1097
    %v1113 = vpack.c.b16 %v1100, %v1099
    %v1114 = vpack.c.b16 %v1102, %v1101
    %v1115 = vpack.c.b16 %v1104, %v1103
    %v1116 = vpack.c.b16 %v1106, %v1105
    %v1117 = vpack.c.b16 %v1108, %v1107
    %v1118 = vpack.c.b16 %v1110, %v1109
    %1127 = vmatprep.subr.bf16.mxu0 0
    %1128 = vmatpush1.bf16.msra.mxu0 %v1118
    %1129 = vmatprep.subr.bf16.mxu0 0
    %1130 = vmatpush1.bf16.msra.mxu0 %v1117
    %1131 = vmatprep.subr.bf16.mxu0 0
    %1132 = vmatpush1.bf16.msra.mxu0 %v1116
    %1133 = vmatprep.subr.bf16.mxu0 0
    %1134 = vmatpush1.bf16.msra.mxu0 %v1115
    %1135 = vmatprep.subr.bf16.mxu0 0
    %1136 = vmatpush1.bf16.msra.mxu0 %v1114
    %1137 = vmatprep.subr.bf16.mxu0 0
    %1138 = vmatpush1.bf16.msra.mxu0 %v1113
    %1139 = vmatprep.subr.bf16.mxu0 0
    %1140 = vmatpush1.bf16.msra.mxu0 %v1112
    %1141 = vmatprep.subr.bf16.mxu0 0
    %1142 = vmatpush1.bf16.msra.mxu0 %v1111
    %1143 = vmatprep.subr.bf16.mxu0 0
    %1144 = vmatpush2.bf16.msra.mxu0 0
    %1145 = vmatprep.subr.bf16.mxu0 0
    %1146 = vmatpush2.bf16.msra.mxu0 0
    %1147 = vmatprep.subr.bf16.mxu0 0
    %1148 = vmatpush2.bf16.msra.mxu0 0
    %1149 = vmatprep.subr.bf16.mxu0 0
    %1150 = vmatpush2.bf16.msra.mxu0 0
    %1151 = vmatprep.subr.bf16.mxu0 0
    %1152 = vmatpush2.bf16.msra.mxu0 0
    %1153 = vmatprep.subr.bf16.mxu0 0
    %1154 = vmatpush2.bf16.msra.mxu0 0
    %1155 = vmatprep.subr.bf16.mxu0 0
    %1156 = vmatpush2.bf16.msra.mxu0 0
    %1157 = vmatprep.subr.bf16.mxu0 0
    %1158 = vmatpush2.bf16.msra.mxu0 0
    %1159 = vmatprep.mubr.bf16.mxu0 0
    %1160 = vmatmul.mubr.bf16.gmra.mxu0 %v1055
    %v1161 = vpop.f32.mrf.mxu0
    %v1162 = vadd.f32 %v1077, %v1161
    %v1163 = vpop.f32.mrf.mxu0
    %v1164 = vpop.f32.mrf.mxu0
    %v1165 = vpop.f32.mrf.mxu0
    %1166 = vdwg.mxu0
    %v1167 = vmax.f32 %v1162, 0.0
    %v1168 = vpack.c.bf16 %v1167, %v1167
    %s1169 = scalar_lea.vmem [#allocation7], 576
    %v1170 = vld [vmem:[%s1169] sm:$0xf]
    %v1171 = vld [vmem:[%s1169 + $0x4] sm:$0xf]
    %v1172 = vld [vmem:[%s1169 + $0x8] sm:$0xf]
    %v1173 = vld [vmem:[%s1169 + $0xc] sm:$0xf]
    %v1174 = vld [vmem:[%s1169 + $0x10] sm:$0xf]
    %v1175 = vld [vmem:[%s1169 + $0x14] sm:$0xf]
    %v1176 = vld [vmem:[%s1169 + $0x18] sm:$0xf]
    %v1177 = vld [vmem:[%s1169 + $0x1c] sm:$0xf]
    %v1178 = vld [vmem:[%s1169 + $0x20] sm:$0xf]
    %v1179 = vld [vmem:[%s1169 + $0x24] sm:$0xf]
    %v1180 = vld [vmem:[%s1169 + $0x28] sm:$0xf]
    %v1181 = vld [vmem:[%s1169 + $0x2c] sm:$0xf]
    %v1182 = vld [vmem:[%s1169 + $0x30] sm:$0xf]
    %v1183 = vld [vmem:[%s1169 + $0x34] sm:$0xf]
    %v1184 = vld [vmem:[%s1169 + $0x38] sm:$0xf]
    %v1185 = vld [vmem:[%s1169 + $0x3c] sm:$0xf]
    %v1187 = vlaneseq
    %v1188 = vshrl.u32 %v1187, 7
    %v1189 = vsub.s32 0, %v1188
    %v1190 = vrot.slane %v82, %v1189
    %v1208 = vunpack.c.l.b16 %v1170
    %v1209 = vunpack.c.l.b16 %v1171
    %v1210 = vunpack.c.l.b16 %v1172
    %v1211 = vunpack.c.l.b16 %v1173
    %v1212 = vunpack.c.l.b16 %v1174
    %v1213 = vunpack.c.l.b16 %v1175
    %v1214 = vunpack.c.l.b16 %v1176
    %v1215 = vunpack.c.l.b16 %v1177
    %v1216 = vunpack.c.l.b16 %v1178
    %v1217 = vunpack.c.l.b16 %v1179
    %v1218 = vunpack.c.l.b16 %v1180
    %v1219 = vunpack.c.l.b16 %v1181
    %v1220 = vunpack.c.l.b16 %v1182
    %v1221 = vunpack.c.l.b16 %v1183
    %v1222 = vunpack.c.l.b16 %v1184
    %v1223 = vunpack.c.l.b16 %v1185
    %v1224 = vpack.c.b16 %v1209, %v1208
    %v1225 = vpack.c.b16 %v1211, %v1210
    %v1226 = vpack.c.b16 %v1213, %v1212
    %v1227 = vpack.c.b16 %v1215, %v1214
    %v1228 = vpack.c.b16 %v1217, %v1216
    %v1229 = vpack.c.b16 %v1219, %v1218
    %v1230 = vpack.c.b16 %v1221, %v1220
    %v1231 = vpack.c.b16 %v1223, %v1222
    %1240 = vmatprep.subr.bf16.mxu0 0
    %1241 = vmatpush1.bf16.msra.mxu0 %v1231
    %1242 = vmatprep.subr.bf16.mxu0 0
    %1243 = vmatpush1.bf16.msra.mxu0 %v1230
    %1244 = vmatprep.subr.bf16.mxu0 0
    %1245 = vmatpush1.bf16.msra.mxu0 %v1229
    %1246 = vmatprep.subr.bf16.mxu0 0
    %1247 = vmatpush1.bf16.msra.mxu0 %v1228
    %1248 = vmatprep.subr.bf16.mxu0 0
    %1249 = vmatpush1.bf16.msra.mxu0 %v1227
    %1250 = vmatprep.subr.bf16.mxu0 0
    %1251 = vmatpush1.bf16.msra.mxu0 %v1226
    %1252 = vmatprep.subr.bf16.mxu0 0
    %1253 = vmatpush1.bf16.msra.mxu0 %v1225
    %1254 = vmatprep.subr.bf16.mxu0 0
    %1255 = vmatpush1.bf16.msra.mxu0 %v1224
    %1256 = vmatprep.subr.bf16.mxu0 0
    %1257 = vmatpush2.bf16.msra.mxu0 0
    %1258 = vmatprep.subr.bf16.mxu0 0
    %1259 = vmatpush2.bf16.msra.mxu0 0
    %1260 = vmatprep.subr.bf16.mxu0 0
    %1261 = vmatpush2.bf16.msra.mxu0 0
    %1262 = vmatprep.subr.bf16.mxu0 0
    %1263 = vmatpush2.bf16.msra.mxu0 0
    %1264 = vmatprep.subr.bf16.mxu0 0
    %1265 = vmatpush2.bf16.msra.mxu0 0
    %1266 = vmatprep.subr.bf16.mxu0 0
    %1267 = vmatpush2.bf16.msra.mxu0 0
    %1268 = vmatprep.subr.bf16.mxu0 0
    %1269 = vmatpush2.bf16.msra.mxu0 0
    %1270 = vmatprep.subr.bf16.mxu0 0
    %1271 = vmatpush2.bf16.msra.mxu0 0
    %1272 = vmatprep.mubr.bf16.mxu0 0
    %1273 = vmatmul.mubr.bf16.gmra.mxu0 %v1168
    %v1274 = vpop.f32.mrf.mxu0
    %v1275 = vadd.f32 %v1190, %v1274
    %v1276 = vpop.f32.mrf.mxu0
    %v1277 = vpop.f32.mrf.mxu0
    %v1278 = vpop.f32.mrf.mxu0
    %1279 = vdwg.mxu0
    %v1280 = vlaneseq
    %v1281 = vand.u32 %v1280, 127
    %vm1282 = vcmp.lt.s32.totalorder %v1281, 2
    %v1283 = vsel %vm1282, %v1275, -1e+30
    %vm1284 = vcmask 1041408
    %v1285 = vsel %vm1284, %v1283, -inf
    %1286 = vmax.xlane.f32.xlu0 %v1285
    %v1287 = vpop.xlane.xlu0 %1286
    %v1288 = vsub.f32 %v1283, %v1287
    %v1289 = vmul.f32 %v1288, 1.442695
    %v1290 = vpow.pop %v1289
    %v1291 = vsel %vm1284, %v1290, 0.0
    %1292 = vadd.xlane.f32.xlu0 %v1291
    %v1293 = vpop.xlane.xlu0 %1292
    %v1294 = vrcp.pop %v1293
    %v1295 = vmul.f32 %v1290, %v1294
    %1296 = vst [vmem:[#allocation10] sm:$0x3] %v1295
    // Predicated region
    $region34: #{_dnn_forward_impl.1} parent=1 // pred_check
      _
    $region35: #{_dnn_forward_impl.1} parent=1 // pred_check_branch
      %1298 = sbr.rel (0) target = $region37
    $region36: #{_dnn_forward_impl.1} parent=1 // pred_region
      %s1300 = ssub.s32 32, 32
      %1301 = vsyncadd [#allocation4], %s1300
      %s1303 = sshll.u32 [#allocation10], 4
      %s1304 = int_to_ptr.vmem [resolvable:$true] %s1303
      %1306 = dma.vmem_to_hbm [thread:$0]  %s1304, 32, %s4, [#allocation4]
    $region37: #{_dnn_forward_impl.1} parent=1 // pred_fallthru
      _
    // Predicated region
    $region38: #{_dnn_forward_impl.1} parent=1 // pred_check
      _
    $region39: #{_dnn_forward_impl.1} parent=1 // pred_check_branch
      %1308 = sbr.rel (0) target = $region41
    $region40: #{_dnn_forward_impl.1} parent=1 // pred_region
      %1309 = dma.done [#allocation4], 32
    $region41: #{_dnn_forward_impl.1} parent=1 // pred_fallthru
      _
    %1310 = vsyncpa [#allocation3], 1
    %1311 = vsyncpa [#allocation6], 1
    %1312 = vsyncpa [#allocation9], 1
    %1313 = vsyncpa [#allocation4], 1

// kernel: _dnn_forward_impl.1
$region0: #{_dnn_forward_impl.1}
  #allocation0 [shape = 'u32[]', space=smem, size = 0x4, offset = 0x4, fixed_abs, tag = 'smem constant byte address 0x4 - core index']
  #allocation1 [shape = 'u32[144,128]{1,0:T(1,128)}', space=vmem, size = 0x12000, scoped, tag = 'internal scratch']
  %s0 = inlined_call_operand.hbm [shape: f32[2,32], index: 0, kind: input, shape index: {}]
  %s1 = inlined_call_operand.hbm [shape: bf16[32,128], index: 1, kind: input, shape index: {}]
  %s2 = inlined_call_operand.hbm [shape: bf16[10,128,128], index: 2, kind: input, shape index: {}]
  %s3 = inlined_call_operand.hbm [shape: f32[11,1,128], index: 3, kind: input, shape index: {}]
  %s4 = inlined_call_operand.hbm [shape: f32[2,128], index: 4, kind: output, shape index: {}]
  %s5 = sld [smem:[#allocation0]]
  $region42: #{_dnn_forward_impl.1} parent=0
    _
  %s7 = ssub.s32 1, %s5
  %s8 = scalar_select 0, %s7, %s5
  $region1: #{_dnn_forward_impl.1} parent=0
    #allocation2 [shape = 'u8[1024]{0}', space=vmem, size = 0x400, scoped, tag = 'input window, operand 0, single buffered']
    #allocation3 [shape = 's32[1]{0}', space=sflag, size = 0x4, scoped, tag = 'scoped memory for _dnn_forward_impl.1']
    #allocation4 [shape = 's32[1]{0}', space=sflag, size = 0x4, scoped, tag = 'scoped memory for _dnn_forward_impl.1']
    #allocation5 [shape = 'u8[8192]{0}', space=vmem, size = 0x2000, scoped, tag = 'input window, operand 1, single buffered']
    #allocation6 [shape = 's32[1]{0}', space=sflag, size = 0x4, scoped, tag = 'scoped memory for _dnn_forward_impl.1']
    #allocation7 [shape = 'u8[327680]{0}', space=vmem, size = 0x50000, scoped, tag = 'input window, operand 2, single buffered']
    #allocation8 [shape = 'u8[5632]{0}', space=vmem, size = 0x1800, scoped, tag = 'input window, operand 3, single buffered']
    #allocation9 [shape = 's32[1]{0}', space=sflag, size = 0x4, scoped, tag = 'scoped memory for _dnn_forward_impl.1']
    #allocation10 [shape = 'u8[1024]{0}', space=vmem, size = 0x400, scoped, tag = 'output window, operand 0, single buffered']
    %9 = vsyncpa [#allocation3], 0
    %10 = vsyncpa [#allocation6], 0
    %11 = vsyncpa [#allocation9], 0
    %12 = vsyncpa [#allocation4], 0
    // Predicated region
    $region2: #{_dnn_forward_impl.1} parent=1 // pred_check
      _
    $region3: #{_dnn_forward_impl.1} parent=1 // pred_check_branch
      %14 = sbr.rel (0) target = $region5
    $region4: #{_dnn_forward_impl.1} parent=1 // pred_region
      %s16 = ssub.s32 32, 32
      %17 = vsyncadd [#allocation3], %s16
      %s19 = sshll.u32 [#allocation2], 4
      %s20 = int_to_ptr.vmem [resolvable:$true] %s19
      %22 = dma.hbm_to_vmem [thread:$0]  %s0, 32, %s20, [#allocation3]
    $region5: #{_dnn_forward_impl.1} parent=1 // pred_fallthru
      _
    // Predicated region
    $region6: #{_dnn_forward_impl.1} parent=1 // pred_check
      _
    $region7: #{_dnn_forward_impl.1} parent=1 // pred_check_branch
      %24 = sbr.rel (0) target = $region9
    $region8: #{_dnn_forward_impl.1} parent=1 // pred_region
      %s26 = ssub.s32 256, 256
      %27 = vsyncadd [#allocation6], %s26
      %s28 = sshll.u32 [#allocation5], 4
      %s29 = int_to_ptr.vmem [resolvable:$true] %s28
      %34 = dma.hbm_to_vmem [thread:$0]  %s1, 256, %s29, [#allocation6], 64, 64, 4
    $region9: #{_dnn_forward_impl.1} parent=1 // pred_fallthru
      _
    // Predicated region
    $region10: #{_dnn_forward_impl.1} parent=1 // pred_check
      _
    $region11: #{_dnn_forward_impl.1} parent=1 // pred_check_branch
      %36 = sbr.rel (0) target = $region13
    $region12: #{_dnn_forward_impl.1} parent=1 // pred_region
      %s38 = ssub.s32 10240, 10240
      %39 = vsyncadd [#allocation6], %s38
      %s40 = sshll.u32 [#allocation7], 4
      %s41 = int_to_ptr.vmem [resolvable:$true] %s40
      %46 = dma.hbm_to_vmem [thread:$0]  %s2, 10240, %s41, [#allocation6], 64, 64, 4
    $region13: #{_dnn_forward_impl.1} parent=1 // pred_fallthru
      _
    // Predicated region
    $region14: #{_dnn_forward_impl.1} parent=1 // pred_check
      _
    $region15: #{_dnn_forward_impl.1} parent=1 // pred_check_branch
      %48 = sbr.rel (0) target = $region17
    $region16: #{_dnn_forward_impl.1} parent=1 // pred_region
      %s50 = ssub.s32 176, 176
      %51 = vsyncadd [#allocation9], %s50
      %s52 = sshll.u32 [#allocation8], 4
      %s53 = int_to_ptr.vmem [resolvable:$true] %s52
      %58 = dma.hbm_to_vmem [thread:$0]  %s3, 176, %s53, [#allocation9], 16, 16, 1
    $region17: #{_dnn_forward_impl.1} parent=1 // pred_fallthru
      _
    // Predicated region
    $region18: #{_dnn_forward_impl.1} parent=1 // pred_check
      _
    $region19: #{_dnn_forward_impl.1} parent=1 // pred_check_branch
      %60 = sbr.rel (0) target = $region21
    $region20: #{_dnn_forward_impl.1} parent=1 // pred_region
      %61 = dma.done [#allocation3], 32
    $region21: #{_dnn_forward_impl.1} parent=1 // pred_fallthru
      _
    // Predicated region
    $region22: #{_dnn_forward_impl.1} parent=1 // pred_check
      _
    $region23: #{_dnn_forward_impl.1} parent=1 // pred_check_branch
      %63 = sbr.rel (0) target = $region25
    $region24: #{_dnn_forward_impl.1} parent=1 // pred_region
      %64 = dma.done [#allocation6], 256
    $region25: #{_dnn_forward_impl.1} parent=1 // pred_fallthru
      _
    // Predicated region
    $region26: #{_dnn_forward_impl.1} parent=1 // pred_check
      _
    $region27: #{_dnn_forward_impl.1} parent=1 // pred_check_branch
      %66 = sbr.rel (0) target = $region29
    $region28: #{_dnn_forward_impl.1} parent=1 // pred_region
      %67 = dma.done [#allocation6], 10240
    $region29: #{_dnn_forward_impl.1} parent=1 // pred_fallthru
      _
    // Predicated region
    $region30: #{_dnn_forward_impl.1} parent=1 // pred_check
      _
    $region31: #{_dnn_forward_impl.1} parent=1 // pred_check_branch
      %69 = sbr.rel (0) target = $region33
    $region32: #{_dnn_forward_impl.1} parent=1 // pred_region
      %70 = dma.done [#allocation9], 176
    $region33: #{_dnn_forward_impl.1} parent=1 // pred_fallthru
      _
    %v72 = vld [vmem:[#allocation8] sm:$0x1]
    %v73 = vld [vmem:[#allocation8 + $0x1] sm:$0x1]
    %v74 = vld [vmem:[#allocation8 + $0x2] sm:$0x1]
    %v75 = vld [vmem:[#allocation8 + $0x3] sm:$0x1]
    %v76 = vld [vmem:[#allocation8 + $0x4] sm:$0x1]
    %v77 = vld [vmem:[#allocation8 + $0x5] sm:$0x1]
    %v78 = vld [vmem:[#allocation8 + $0x6] sm:$0x1]
    %v79 = vld [vmem:[#allocation8 + $0x7] sm:$0x1]
    %v80 = vld [vmem:[#allocation8 + $0x8] sm:$0x1]
    %v81 = vld [vmem:[#allocation8 + $0x9] sm:$0x1]
    %v82 = vld [vmem:[#allocation8 + $0xa] sm:$0x1]
    %v83 = vld [vmem:[#allocation2] sm:$0x3]
    %v84 = vpack.c.bf16 %v83, %v83
    %v85 = vld [vmem:[#allocation5] sm:$0xf]
    %v86 = vld [vmem:[#allocation5 + $0x4] sm:$0xf]
    %v87 = vld [vmem:[#allocation5 + $0x8] sm:$0xf]
    %v88 = vld [vmem:[#allocation5 + $0xc] sm:$0xf]
    %v90 = vlaneseq
    %v91 = vshrl.u32 %v90, 7
    %v92 = vsub.s32 0, %v91
    %v93 = vrot.slane %v72, %v92
    %v99 = vunpack.c.l.b16 %v85
    %v100 = vunpack.c.l.b16 %v86
    %v101 = vunpack.c.l.b16 %v87
    %v102 = vunpack.c.l.b16 %v88
    %v103 = vpack.c.b16 %v100, %v99
    %v104 = vpack.c.b16 %v102, %v101
    %vm107 = vcmask 261120
    %v109 = vsel %vm107, %v84, 0
    %111 = vmatprep.subr.bf16.mxu0 0
    %112 = vmatpush1.bf16.msra.mxu0 0
    %113 = vmatprep.subr.bf16.mxu0 0
    %114 = vmatpush1.bf16.msra.mxu0 0
    %115 = vmatprep.subr.bf16.mxu0 0
    %116 = vmatpush1.bf16.msra.mxu0 0
    %117 = vmatprep.subr.bf16.mxu0 0
    %118 = vmatpush1.bf16.msra.mxu0 0
    %119 = vmatprep.subr.bf16.mxu0 0
    %120 = vmatpush1.bf16.msra.mxu0 0
    %121 = vmatprep.subr.bf16.mxu0 0
    %122 = vmatpush1.bf16.msra.mxu0 0
    %123 = vmatprep.subr.bf16.mxu0 0
    %124 = vmatpush1.bf16.msra.mxu0 %v104
    %125 = vmatprep.subr.bf16.mxu0 0
    %126 = vmatpush1.bf16.msra.mxu0 %v103
    %127 = vmatprep.subr.bf16.mxu0 0
    %128 = vmatpush2.bf16.msra.mxu0 0
    %129 = vmatprep.subr.bf16.mxu0 0
    %130 = vmatpush2.bf16.msra.mxu0 0
    %131 = vmatprep.subr.bf16.mxu0 0
    %132 = vmatpush2.bf16.msra.mxu0 0
    %133 = vmatprep.subr.bf16.mxu0 0
    %134 = vmatpush2.bf16.msra.mxu0 0
    %135 = vmatprep.subr.bf16.mxu0 0
    %136 = vmatpush2.bf16.msra.mxu0 0
    %137 = vmatprep.subr.bf16.mxu0 0
    %138 = vmatpush2.bf16.msra.mxu0 0
    %139 = vmatprep.subr.bf16.mxu0 0
    %140 = vmatpush2.bf16.msra.mxu0 0
    %141 = vmatprep.subr.bf16.mxu0 0
    %142 = vmatpush2.bf16.msra.mxu0 0
    %143 = vmatprep.mubr.bf16.mxu0 0
    %144 = vmatmul.mubr.bf16.gmra.mxu0 %v109
    %v145 = vpop.f32.mrf.mxu0
    %v146 = vadd.f32 %v93, %v145
    %v147 = vpop.f32.mrf.mxu0
    %v148 = vpop.f32.mrf.mxu0
    %v149 = vpop.f32.mrf.mxu0
    %150 = vdwg.mxu0
    %v151 = vmax.f32 %v146, 0.0
    %v152 = vpack.c.bf16 %v151, %v151
    %v153 = vld [vmem:[#allocation7] sm:$0xf]
    %v154 = vld [vmem:[#allocation7 + $0x4] sm:$0xf]
    %v155 = vld [vmem:[#allocation7 + $0x8] sm:$0xf]
    %v156 = vld [vmem:[#allocation7 + $0xc] sm:$0xf]
    %v157 = vld [vmem:[#allocation7 + $0x10] sm:$0xf]
    %v158 = vld [vmem:[#allocation7 + $0x14] sm:$0xf]
    %v159 = vld [vmem:[#allocation7 + $0x18] sm:$0xf]
    %v160 = vld [vmem:[#allocation7 + $0x1c] sm:$0xf]
    %v161 = vld [vmem:[#allocation7 + $0x20] sm:$0xf]
    %v162 = vld [vmem:[#allocation7 + $0x24] sm:$0xf]
    %v163 = vld [vmem:[#allocation7 + $0x28] sm:$0xf]
    %v164 = vld [vmem:[#allocation7 + $0x2c] sm:$0xf]
    %v165 = vld [vmem:[#allocation7 + $0x30] sm:$0xf]
    %v166 = vld [vmem:[#allocation7 + $0x34] sm:$0xf]
    %v167 = vld [vmem:[#allocation7 + $0x38] sm:$0xf]
    %v168 = vld [vmem:[#allocation7 + $0x3c] sm:$0xf]
    %v170 = vlaneseq
    %v171 = vshrl.u32 %v170, 7
    %v172 = vsub.s32 0, %v171
    %v173 = vrot.slane %v73, %v172
    %v191 = vunpack.c.l.b16 %v153
    %v192 = vunpack.c.l.b16 %v154
    %v193 = vunpack.c.l.b16 %v155
    %v194 = vunpack.c.l.b16 %v156
    %v195 = vunpack.c.l.b16 %v157
    %v196 = vunpack.c.l.b16 %v158
    %v197 = vunpack.c.l.b16 %v159
    %v198 = vunpack.c.l.b16 %v160
    %v199 = vunpack.c.l.b16 %v161
    %v200 = vunpack.c.l.b16 %v162
    %v201 = vunpack.c.l.b16 %v163
    %v202 = vunpack.c.l.b16 %v164
    %v203 = vunpack.c.l.b16 %v165
    %v204 = vunpack.c.l.b16 %v166
    %v205 = vunpack.c.l.b16 %v167
    %v206 = vunpack.c.l.b16 %v168
    %v207 = vpack.c.b16 %v192, %v191
    %v208 = vpack.c.b16 %v194, %v193
    %v209 = vpack.c.b16 %v196, %v195
    %v210 = vpack.c.b16 %v198, %v197
    %v211 = vpack.c.b16 %v200, %v199
    %v212 = vpack.c.b16 %v202, %v201
    %v213 = vpack.c.b16 %v204, %v203
    %v214 = vpack.c.b16 %v206, %v205
    %223 = vmatprep.subr.bf16.mxu0 0
    %224 = vmatpush1.bf16.msra.mxu0 %v214
    %225 = vmatprep.subr.bf16.mxu0 0
    %226 = vmatpush1.bf16.msra.mxu0 %v213
    %227 = vmatprep.subr.bf16.mxu0 0
    %228 = vmatpush1.bf16.msra.mxu0 %v212
    %229 = vmatprep.subr.bf16.mxu0 0
    %230 = vmatpush1.bf16.msra.mxu0 %v211
    %231 = vmatprep.subr.bf16.mxu0 0
    %232 = vmatpush1.bf16.msra.mxu0 %v210
    %233 = vmatprep.subr.bf16.mxu0 0
    %234 = vmatpush1.bf16.msra.mxu0 %v209
    %235 = vmatprep.subr.bf16.mxu0 0
    %236 = vmatpush1.bf16.msra.mxu0 %v208
    %237 = vmatprep.subr.bf16.mxu0 0
    %238 = vmatpush1.bf16.msra.mxu0 %v207
    %239 = vmatprep.subr.bf16.mxu0 0
    %240 = vmatpush2.bf16.msra.mxu0 0
    %241 = vmatprep.subr.bf16.mxu0 0
    %242 = vmatpush2.bf16.msra.mxu0 0
    %243 = vmatprep.subr.bf16.mxu0 0
    %244 = vmatpush2.bf16.msra.mxu0 0
    %245 = vmatprep.subr.bf16.mxu0 0
    %246 = vmatpush2.bf16.msra.mxu0 0
    %247 = vmatprep.subr.bf16.mxu0 0
    %248 = vmatpush2.bf16.msra.mxu0 0
    %249 = vmatprep.subr.bf16.mxu0 0
    %250 = vmatpush2.bf16.msra.mxu0 0
    %251 = vmatprep.subr.bf16.mxu0 0
    %252 = vmatpush2.bf16.msra.mxu0 0
    %253 = vmatprep.subr.bf16.mxu0 0
    %254 = vmatpush2.bf16.msra.mxu0 0
    %255 = vmatprep.mubr.bf16.mxu0 0
    %256 = vmatmul.mubr.bf16.gmra.mxu0 %v152
    %v257 = vpop.f32.mrf.mxu0
    %v258 = vadd.f32 %v173, %v257
    %v259 = vpop.f32.mrf.mxu0
    %v260 = vpop.f32.mrf.mxu0
    %v261 = vpop.f32.mrf.mxu0
    %262 = vdwg.mxu0
    %v263 = vmax.f32 %v258, 0.0
    %v264 = vpack.c.bf16 %v263, %v263
    %s265 = scalar_lea.vmem [#allocation7], 64
    %v266 = vld [vmem:[%s265] sm:$0xf]
    %v267 = vld [vmem:[%s265 + $0x4] sm:$0xf]
    %v268 = vld [vmem:[%s265 + $0x8] sm:$0xf]
    %v269 = vld [vmem:[%s265 + $0xc] sm:$0xf]
    %v270 = vld [vmem:[%s265 + $0x10] sm:$0xf]
    %v271 = vld [vmem:[%s265 + $0x14] sm:$0xf]
    %v272 = vld [vmem:[%s265 + $0x18] sm:$0xf]
    %v273 = vld [vmem:[%s265 + $0x1c] sm:$0xf]
    %v274 = vld [vmem:[%s265 + $0x20] sm:$0xf]
    %v275 = vld [vmem:[%s265 + $0x24] sm:$0xf]
    %v276 = vld [vmem:[%s265 + $0x28] sm:$0xf]
    %v277 = vld [vmem:[%s265 + $0x2c] sm:$0xf]
    %v278 = vld [vmem:[%s265 + $0x30] sm:$0xf]
    %v279 = vld [vmem:[%s265 + $0x34] sm:$0xf]
    %v280 = vld [vmem:[%s265 + $0x38] sm:$0xf]
    %v281 = vld [vmem:[%s265 + $0x3c] sm:$0xf]
    %v283 = vlaneseq
    %v284 = vshrl.u32 %v283, 7
    %v285 = vsub.s32 0, %v284
    %v286 = vrot.slane %v74, %v285
    %v304 = vunpack.c.l.b16 %v266
    %v305 = vunpack.c.l.b16 %v267
    %v306 = vunpack.c.l.b16 %v268
    %v307 = vunpack.c.l.b16 %v269
    %v308 = vunpack.c.l.b16 %v270
    %v309 = vunpack.c.l.b16 %v271
    %v310 = vunpack.c.l.b16 %v272
    %v311 = vunpack.c.l.b16 %v273
    %v312 = vunpack.c.l.b16 %v274
    %v313 = vunpack.c.l.b16 %v275
    %v314 = vunpack.c.l.b16 %v276
    %v315 = vunpack.c.l.b16 %v277
    %v316 = vunpack.c.l.b16 %v278
    %v317 = vunpack.c.l.b16 %v279
    %v318 = vunpack.c.l.b16 %v280
    %v319 = vunpack.c.l.b16 %v281
    %v320 = vpack.c.b16 %v305, %v304
    %v321 = vpack.c.b16 %v307, %v306
    %v322 = vpack.c.b16 %v309, %v308
    %v323 = vpack.c.b16 %v311, %v310
    %v324 = vpack.c.b16 %v313, %v312
    %v325 = vpack.c.b16 %v315, %v314
    %v326 = vpack.c.b16 %v317, %v316
    %v327 = vpack.c.b16 %v319, %v318
    %336 = vmatprep.subr.bf16.mxu0 0
    %337 = vmatpush1.bf16.msra.mxu0 %v327
    %338 = vmatprep.subr.bf16.mxu0 0
    %339 = vmatpush1.bf16.msra.mxu0 %v326
    %340 = vmatprep.subr.bf16.mxu0 0
    %341 = vmatpush1.bf16.msra.mxu0 %v325
    %342 = vmatprep.subr.bf16.mxu0 0
    %343 = vmatpush1.bf16.msra.mxu0 %v324
    %344 = vmatprep.subr.bf16.mxu0 0
    %345 = vmatpush1.bf16.msra.mxu0 %v323
    %346 = vmatprep.subr.bf16.mxu0 0
    %347 = vmatpush1.bf16.msra.mxu0 %v322
    %348 = vmatprep.subr.bf16.mxu0 0
    %349 = vmatpush1.bf16.msra.mxu0 %v321
    %350 = vmatprep.subr.bf16.mxu0 0
    %351 = vmatpush1.bf16.msra.mxu0 %v320
    %352 = vmatprep.subr.bf16.mxu0 0
    %353 = vmatpush2.bf16.msra.mxu0 0
    %354 = vmatprep.subr.bf16.mxu0 0
    %355 = vmatpush2.bf16.msra.mxu0 0
    %356 = vmatprep.subr.bf16.mxu0 0
    %357 = vmatpush2.bf16.msra.mxu0 0
    %358 = vmatprep.subr.bf16.mxu0 0
    %359 = vmatpush2.bf16.msra.mxu0 0
    %360 = vmatprep.subr.bf16.mxu0 0
    %361 = vmatpush2.bf16.msra.mxu0 0
    %362 = vmatprep.subr.bf16.mxu0 0
    %363 = vmatpush2.bf16.msra.mxu0 0
    %364 = vmatprep.subr.bf16.mxu0 0
    %365 = vmatpush2.bf16.msra.mxu0 0
    %366 = vmatprep.subr.bf16.mxu0 0
    %367 = vmatpush2.bf16.msra.mxu0 0
    %368 = vmatprep.mubr.bf16.mxu0 0
    %369 = vmatmul.mubr.bf16.gmra.mxu0 %v264
    %v370 = vpop.f32.mrf.mxu0
    %v371 = vadd.f32 %v286, %v370
    %v372 = vpop.f32.mrf.mxu0
    %v373 = vpop.f32.mrf.mxu0
    %v374 = vpop.f32.mrf.mxu0
    %375 = vdwg.mxu0
    %v376 = vmax.f32 %v371, 0.0
    %v377 = vpack.c.bf16 %v376, %v376
    %s378 = scalar_lea.vmem [#allocation7], 128
    %v379 = vld [vmem:[%s378] sm:$0xf]
    %v380 = vld [vmem:[%s378 + $0x4] sm:$0xf]
    %v381 = vld [vmem:[%s378 + $0x8] sm:$0xf]
    %v382 = vld [vmem:[%s378 + $0xc] sm:$0xf]
    %v383 = vld [vmem:[%s378 + $0x10] sm:$0xf]
    %v384 = vld [vmem:[%s378 + $0x14] sm:$0xf]
    %v385 = vld [vmem:[%s378 + $0x18] sm:$0xf]
    %v386 = vld [vmem:[%s378 + $0x1c] sm:$0xf]
    %v387 = vld [vmem:[%s378 + $0x20] sm:$0xf]
    %v388 = vld [vmem:[%s378 + $0x24] sm:$0xf]
    %v389 = vld [vmem:[%s378 + $0x28] sm:$0xf]
    %v390 = vld [vmem:[%s378 + $0x2c] sm:$0xf]
    %v391 = vld [vmem:[%s378 + $0x30] sm:$0xf]
    %v392 = vld [vmem:[%s378 + $0x34] sm:$0xf]
    %v393 = vld [vmem:[%s378 + $0x38] sm:$0xf]
    %v394 = vld [vmem:[%s378 + $0x3c] sm:$0xf]
    %v396 = vlaneseq
    %v397 = vshrl.u32 %v396, 7
    %v398 = vsub.s32 0, %v397
    %v399 = vrot.slane %v75, %v398
    %v417 = vunpack.c.l.b16 %v379
    %v418 = vunpack.c.l.b16 %v380
    %v419 = vunpack.c.l.b16 %v381
    %v420 = vunpack.c.l.b16 %v382
    %v421 = vunpack.c.l.b16 %v383
    %v422 = vunpack.c.l.b16 %v384
    %v423 = vunpack.c.l.b16 %v385
    %v424 = vunpack.c.l.b16 %v386
    %v425 = vunpack.c.l.b16 %v387
    %v426 = vunpack.c.l.b16 %v388
    %v427 = vunpack.c.l.b16 %v389
    %v428 = vunpack.c.l.b16 %v390
    %v429 = vunpack.c.l.b16 %v391
    %v430 = vunpack.c.l.b16 %v392
    %v431 = vunpack.c.l.b16 %v393
    %v432 = vunpack.c.l.b16 %v394
    %v433 = vpack.c.b16 %v418, %v417
    %v434 = vpack.c.b16 %v420, %v419
    %v435 = vpack.c.b16 %v422, %v421
    %v436 = vpack.c.b16 %v424, %v423
    %v437 = vpack.c.b16 %v426, %v425
    %v438 = vpack.c.b16 %v428, %v427
    %v439 = vpack.c.b16 %v430, %v429
    %v440 = vpack.c.b16 %v432, %v431
    %449 = vmatprep.subr.bf16.mxu0 0
    %450 = vmatpush1.bf16.msra.mxu0 %v440
    %451 = vmatprep.subr.bf16.mxu0 0
    %452 = vmatpush1.bf16.msra.mxu0 %v439
    %453 = vmatprep.subr.bf16.mxu0 0
    %454 = vmatpush1.bf16.msra.mxu0 %v438
    %455 = vmatprep.subr.bf16.mxu0 0
    %456 = vmatpush1.bf16.msra.mxu0 %v437
    %457 = vmatprep.subr.bf16.mxu0 0
    %458 = vmatpush1.bf16.msra.mxu0 %v436
    %459 = vmatprep.subr.bf16.mxu0 0
    %460 = vmatpush1.bf16.msra.mxu0 %v435
    %461 = vmatprep.subr.bf16.mxu0 0
    %462 = vmatpush1.bf16.msra.mxu0 %v434
    %463 = vmatprep.subr.bf16.mxu0 0
    %464 = vmatpush1.bf16.msra.mxu0 %v433
    %465 = vmatprep.subr.bf16.mxu0 0
    %466 = vmatpush2.bf16.msra.mxu0 0
    %467 = vmatprep.subr.bf16.mxu0 0
    %468 = vmatpush2.bf16.msra.mxu0 0
    %469 = vmatprep.subr.bf16.mxu0 0
    %470 = vmatpush2.bf16.msra.mxu0 0
    %471 = vmatprep.subr.bf16.mxu0 0
    %472 = vmatpush2.bf16.msra.mxu0 0
    %473 = vmatprep.subr.bf16.mxu0 0
    %474 = vmatpush2.bf16.msra.mxu0 0
    %475 = vmatprep.subr.bf16.mxu0 0
    %476 = vmatpush2.bf16.msra.mxu0 0
    %477 = vmatprep.subr.bf16.mxu0 0
    %478 = vmatpush2.bf16.msra.mxu0 0
    %479 = vmatprep.subr.bf16.mxu0 0
    %480 = vmatpush2.bf16.msra.mxu0 0
    %481 = vmatprep.mubr.bf16.mxu0 0
    %482 = vmatmul.mubr.bf16.gmra.mxu0 %v377
    %v483 = vpop.f32.mrf.mxu0
    %v484 = vadd.f32 %v399, %v483
    %v485 = vpop.f32.mrf.mxu0
    %v486 = vpop.f32.mrf.mxu0
    %v487 = vpop.f32.mrf.mxu0
    %488 = vdwg.mxu0
    %v489 = vmax.f32 %v484, 0.0
    %v490 = vpack.c.bf16 %v489, %v489
    %s491 = scalar_lea.vmem [#allocation7], 192
    %v492 = vld [vmem:[%s491] sm:$0xf]
    %v493 = vld [vmem:[%s491 + $0x4] sm:$0xf]
    %v494 = vld [vmem:[%s491 + $0x8] sm:$0xf]
    %v495 = vld [vmem:[%s491 + $0xc] sm:$0xf]
    %v496 = vld [vmem:[%s491 + $0x10] sm:$0xf]
    %v497 = vld [vmem:[%s491 + $0x14] sm:$0xf]
    %v498 = vld [vmem:[%s491 + $0x18] sm:$0xf]
    %v499 = vld [vmem:[%s491 + $0x1c] sm:$0xf]
    %v500 = vld [vmem:[%s491 + $0x20] sm:$0xf]
    %v501 = vld [vmem:[%s491 + $0x24] sm:$0xf]
    %v502 = vld [vmem:[%s491 + $0x28] sm:$0xf]
    %v503 = vld [vmem:[%s491 + $0x2c] sm:$0xf]
    %v504 = vld [vmem:[%s491 + $0x30] sm:$0xf]
    %v505 = vld [vmem:[%s491 + $0x34] sm:$0xf]
    %v506 = vld [vmem:[%s491 + $0x38] sm:$0xf]
    %v507 = vld [vmem:[%s491 + $0x3c] sm:$0xf]
    %v509 = vlaneseq
    %v510 = vshrl.u32 %v509, 7
    %v511 = vsub.s32 0, %v510
    %v512 = vrot.slane %v76, %v511
    %v530 = vunpack.c.l.b16 %v492
    %v531 = vunpack.c.l.b16 %v493
    %v532 = vunpack.c.l.b16 %v494
    %v533 = vunpack.c.l.b16 %v495
    %v534 = vunpack.c.l.b16 %v496
    %v535 = vunpack.c.l.b16 %v497
    %v536 = vunpack.c.l.b16 %v498
    %v537 = vunpack.c.l.b16 %v499
    %v538 = vunpack.c.l.b16 %v500
    %v539 = vunpack.c.l.b16 %v501
    %v540 = vunpack.c.l.b16 %v502
    %v541 = vunpack.c.l.b16 %v503
    %v542 = vunpack.c.l.b16 %v504
    %v543 = vunpack.c.l.b16 %v505
    %v544 = vunpack.c.l.b16 %v506
    %v545 = vunpack.c.l.b16 %v507
    %v546 = vpack.c.b16 %v531, %v530
    %v547 = vpack.c.b16 %v533, %v532
    %v548 = vpack.c.b16 %v535, %v534
    %v549 = vpack.c.b16 %v537, %v536
    %v550 = vpack.c.b16 %v539, %v538
    %v551 = vpack.c.b16 %v541, %v540
    %v552 = vpack.c.b16 %v543, %v542
    %v553 = vpack.c.b16 %v545, %v544
    %562 = vmatprep.subr.bf16.mxu0 0
    %563 = vmatpush1.bf16.msra.mxu0 %v553
    %564 = vmatprep.subr.bf16.mxu0 0
    %565 = vmatpush1.bf16.msra.mxu0 %v552
    %566 = vmatprep.subr.bf16.mxu0 0
    %567 = vmatpush1.bf16.msra.mxu0 %v551
    %568 = vmatprep.subr.bf16.mxu0 0
    %569 = vmatpush1.bf16.msra.mxu0 %v550
    %570 = vmatprep.subr.bf16.mxu0 0
    %571 = vmatpush1.bf16.msra.mxu0 %v549
    %572 = vmatprep.subr.bf16.mxu0 0
    %573 = vmatpush1.bf16.msra.mxu0 %v548
    %574 = vmatprep.subr.bf16.mxu0 0
    %575 = vmatpush1.bf16.msra.mxu0 %v547
    %576 = vmatprep.subr.bf16.mxu0 0
    %577 = vmatpush1.bf16.msra.mxu0 %v546
    %578 = vmatprep.subr.bf16.mxu0 0
    %579 = vmatpush2.bf16.msra.mxu0 0
    %580 = vmatprep.subr.bf16.mxu0 0
    %581 = vmatpush2.bf16.msra.mxu0 0
    %582 = vmatprep.subr.bf16.mxu0 0
    %583 = vmatpush2.bf16.msra.mxu0 0
    %584 = vmatprep.subr.bf16.mxu0 0
    %585 = vmatpush2.bf16.msra.mxu0 0
    %586 = vmatprep.subr.bf16.mxu0 0
    %587 = vmatpush2.bf16.msra.mxu0 0
    %588 = vmatprep.subr.bf16.mxu0 0
    %589 = vmatpush2.bf16.msra.mxu0 0
    %590 = vmatprep.subr.bf16.mxu0 0
    %591 = vmatpush2.bf16.msra.mxu0 0
    %592 = vmatprep.subr.bf16.mxu0 0
    %593 = vmatpush2.bf16.msra.mxu0 0
    %594 = vmatprep.mubr.bf16.mxu0 0
    %595 = vmatmul.mubr.bf16.gmra.mxu0 %v490
    %v596 = vpop.f32.mrf.mxu0
    %v597 = vadd.f32 %v512, %v596
    %v598 = vpop.f32.mrf.mxu0
    %v599 = vpop.f32.mrf.mxu0
    %v600 = vpop.f32.mrf.mxu0
    %601 = vdwg.mxu0
    %v602 = vmax.f32 %v597, 0.0
    %v603 = vpack.c.bf16 %v602, %v602
    %s604 = scalar_lea.vmem [#allocation7], 256
    %v605 = vld [vmem:[%s604] sm:$0xf]
    %v606 = vld [vmem:[%s604 + $0x4] sm:$0xf]
    %v607 = vld [vmem:[%s604 + $0x8] sm:$0xf]
    %v608 = vld [vmem:[%s604 + $0xc] sm:$0xf]
    %v609 = vld [vmem:[%s604 + $0x10] sm:$0xf]
    %v610 = vld [vmem:[%s604 + $0x14] sm:$0xf]
    %v611 = vld [vmem:[%s604 + $0x18] sm:$0xf]
    %v612 = vld [vmem:[%s604 + $0x1c] sm:$0xf]
    %v613 = vld [vmem:[%s604 + $0x20] sm:$0xf]
    %v614 = vld [vmem:[%s604 + $0x24] sm:$0xf]
    %v615 = vld [vmem:[%s604 + $0x28] sm:$0xf]
    %v616 = vld [vmem:[%s604 + $0x2c] sm:$0xf]
    %v617 = vld [vmem:[%s604 + $0x30] sm:$0xf]
    %v618 = vld [vmem:[%s604 + $0x34] sm:$0xf]
    %v619 = vld [vmem:[%s604 + $0x38] sm:$0xf]
    %v620 = vld [vmem:[%s604 + $0x3c] sm:$0xf]
    %v622 = vlaneseq
    %v623 = vshrl.u32 %v622, 7
    %v624 = vsub.s32 0, %v623
    %v625 = vrot.slane %v77, %v624
    %v643 = vunpack.c.l.b16 %v605
    %v644 = vunpack.c.l.b16 %v606
    %v645 = vunpack.c.l.b16 %v607
    %v646 = vunpack.c.l.b16 %v608
    %v647 = vunpack.c.l.b16 %v609
    %v648 = vunpack.c.l.b16 %v610
    %v649 = vunpack.c.l.b16 %v611
    %v650 = vunpack.c.l.b16 %v612
    %v651 = vunpack.c.l.b16 %v613
    %v652 = vunpack.c.l.b16 %v614
    %v653 = vunpack.c.l.b16 %v615
    %v654 = vunpack.c.l.b16 %v616
    %v655 = vunpack.c.l.b16 %v617
    %v656 = vunpack.c.l.b16 %v618
    %v657 = vunpack.c.l.b16 %v619
    %v658 = vunpack.c.l.b16 %v620
    %v659 = vpack.c.b16 %v644, %v643
    %v660 = vpack.c.b16 %v646, %v645
    %v661 = vpack.c.b16 %v648, %v647
    %v662 = vpack.c.b16 %v650, %v649
    %v663 = vpack.c.b16 %v652, %v651
    %v664 = vpack.c.b16 %v654, %v653
    %v665 = vpack.c.b16 %v656, %v655
    %v666 = vpack.c.b16 %v658, %v657
    %675 = vmatprep.subr.bf16.mxu0 0
    %676 = vmatpush1.bf16.msra.mxu0 %v666
    %677 = vmatprep.subr.bf16.mxu0 0
    %678 = vmatpush1.bf16.msra.mxu0 %v665
    %679 = vmatprep.subr.bf16.mxu0 0
    %680 = vmatpush1.bf16.msra.mxu0 %v664
    %681 = vmatprep.subr.bf16.mxu0 0
    %682 = vmatpush1.bf16.msra.mxu0 %v663
    %683 = vmatprep.subr.bf16.mxu0 0
    %684 = vmatpush1.bf16.msra.mxu0 %v662
    %685 = vmatprep.subr.bf16.mxu0 0
    %686 = vmatpush1.bf16.msra.mxu0 %v661
    %687 = vmatprep.subr.bf16.mxu0 0
    %688 = vmatpush1.bf16.msra.mxu0 %v660
    %689 = vmatprep.subr.bf16.mxu0 0
    %690 = vmatpush1.bf16.msra.mxu0 %v659
    %691 = vmatprep.subr.bf16.mxu0 0
    %692 = vmatpush2.bf16.msra.mxu0 0
    %693 = vmatprep.subr.bf16.mxu0 0
    %694 = vmatpush2.bf16.msra.mxu0 0
    %695 = vmatprep.subr.bf16.mxu0 0
    %696 = vmatpush2.bf16.msra.mxu0 0
    %697 = vmatprep.subr.bf16.mxu0 0
    %698 = vmatpush2.bf16.msra.mxu0 0
    %699 = vmatprep.subr.bf16.mxu0 0
    %700 = vmatpush2.bf16.msra.mxu0 0
    %701 = vmatprep.subr.bf16.mxu0 0
    %702 = vmatpush2.bf16.msra.mxu0 0
    %703 = vmatprep.subr.bf16.mxu0 0
    %704 = vmatpush2.bf16.msra.mxu0 0
    %705 = vmatprep.subr.bf16.mxu0 0
    %706 = vmatpush2.bf16.msra.mxu0 0
    %707 = vmatprep.mubr.bf16.mxu0 0
    %708 = vmatmul.mubr.bf16.gmra.mxu0 %v603
    %v709 = vpop.f32.mrf.mxu0
    %v710 = vadd.f32 %v625, %v709
    %v711 = vpop.f32.mrf.mxu0
    %v712 = vpop.f32.mrf.mxu0
    %v713 = vpop.f32.mrf.mxu0
    %714 = vdwg.mxu0
    %v715 = vmax.f32 %v710, 0.0
    %v716 = vpack.c.bf16 %v715, %v715
    %s717 = scalar_lea.vmem [#allocation7], 320
    %v718 = vld [vmem:[%s717] sm:$0xf]
    %v719 = vld [vmem:[%s717 + $0x4] sm:$0xf]
    %v720 = vld [vmem:[%s717 + $0x8] sm:$0xf]
    %v721 = vld [vmem:[%s717 + $0xc] sm:$0xf]
    %v722 = vld [vmem:[%s717 + $0x10] sm:$0xf]
    %v723 = vld [vmem:[%s717 + $0x14] sm:$0xf]
    %v724 = vld [vmem:[%s717 + $0x18] sm:$0xf]
    %v725 = vld [vmem:[%s717 + $0x1c] sm:$0xf]
    %v726 = vld [vmem:[%s717 + $0x20] sm:$0xf]
    %v727 = vld [vmem:[%s717 + $0x24] sm:$0xf]
    %v728 = vld [vmem:[%s717 + $0x28] sm:$0xf]
    %v729 = vld [vmem:[%s717 + $0x2c] sm:$0xf]
    %v730 = vld [vmem:[%s717 + $0x30] sm:$0xf]
    %v731 = vld [vmem:[%s717 + $0x34] sm:$0xf]
    %v732 = vld [vmem:[%s717 + $0x38] sm:$0xf]
    %v733 = vld [vmem:[%s717 + $0x3c] sm:$0xf]
    %v735 = vlaneseq
    %v736 = vshrl.u32 %v735, 7
    %v737 = vsub.s32 0, %v736
    %v738 = vrot.slane %v78, %v737
    %v756 = vunpack.c.l.b16 %v718
    %v757 = vunpack.c.l.b16 %v719
    %v758 = vunpack.c.l.b16 %v720
    %v759 = vunpack.c.l.b16 %v721
    %v760 = vunpack.c.l.b16 %v722
    %v761 = vunpack.c.l.b16 %v723
    %v762 = vunpack.c.l.b16 %v724
    %v763 = vunpack.c.l.b16 %v725
    %v764 = vunpack.c.l.b16 %v726
    %v765 = vunpack.c.l.b16 %v727
    %v766 = vunpack.c.l.b16 %v728
    %v767 = vunpack.c.l.b16 %v729
    %v768 = vunpack.c.l.b16 %v730
    %v769 = vunpack.c.l.b16 %v731
    %v770 = vunpack.c.l.b16 %v732
    %v771 = vunpack.c.l.b16 %v733
    %v772 = vpack.c.b16 %v757, %v756
    %v773 = vpack.c.b16 %v759, %v758
    %v774 = vpack.c.b16 %v761, %v760
    %v775 = vpack.c.b16 %v763, %v762
    %v776 = vpack.c.b16 %v765, %v764
    %v777 = vpack.c.b16 %v767, %v766
    %v778 = vpack.c.b16 %v769, %v768
    %v779 = vpack.c.b16 %v771, %v770
    %788 = vmatprep.subr.bf16.mxu0 0
    %789 = vmatpush1.bf16.msra.mxu0 %v779
    %790 = vmatprep.subr.bf16.mxu0 0
    %791 = vmatpush1.bf16.msra.mxu0 %v778
    %792 = vmatprep.subr.bf16.mxu0 0
    %793 = vmatpush1.bf16.msra.mxu0 %v777
    %794 = vmatprep.subr.bf16.mxu0 0
    %795 = vmatpush1.bf16.msra.mxu0 %v776
    %796 = vmatprep.subr.bf16.mxu0 0
    %797 = vmatpush1.bf16.msra.mxu0 %v775
    %798 = vmatprep.subr.bf16.mxu0 0
    %799 = vmatpush1.bf16.msra.mxu0 %v774
    %800 = vmatprep.subr.bf16.mxu0 0
    %801 = vmatpush1.bf16.msra.mxu0 %v773
    %802 = vmatprep.subr.bf16.mxu0 0
    %803 = vmatpush1.bf16.msra.mxu0 %v772
    %804 = vmatprep.subr.bf16.mxu0 0
    %805 = vmatpush2.bf16.msra.mxu0 0
    %806 = vmatprep.subr.bf16.mxu0 0
    %807 = vmatpush2.bf16.msra.mxu0 0
    %808 = vmatprep.subr.bf16.mxu0 0
    %809 = vmatpush2.bf16.msra.mxu0 0
    %810 = vmatprep.subr.bf16.mxu0 0
    %811 = vmatpush2.bf16.msra.mxu0 0
    %812 = vmatprep.subr.bf16.mxu0 0
    %813 = vmatpush2.bf16.msra.mxu0 0
    %814 = vmatprep.subr.bf16.mxu0 0
    %815 = vmatpush2.bf16.msra.mxu0 0
    %816 = vmatprep.subr.bf16.mxu0 0
    %817 = vmatpush2.bf16.msra.mxu0 0
    %818 = vmatprep.subr.bf16.mxu0 0
    %819 = vmatpush2.bf16.msra.mxu0 0
    %820 = vmatprep.mubr.bf16.mxu0 0
    %821 = vmatmul.mubr.bf16.gmra.mxu0 %v716
    %v822 = vpop.f32.mrf.mxu0
    %v823 = vadd.f32 %v738, %v822
    %v824 = vpop.f32.mrf.mxu0
    %v825 = vpop.f32.mrf.mxu0
    %v826 = vpop.f32.mrf.mxu0
    %827 = vdwg.mxu0
    %v828 = vmax.f32 %v823, 0.0
    %v829 = vpack.c.bf16 %v828, %v828
    %s830 = scalar_lea.vmem [#allocation7], 384
    %v831 = vld [vmem:[%s830] sm:$0xf]
    %v832 = vld [vmem:[%s830 + $0x4] sm:$0xf]
    %v833 = vld [vmem:[%s830 + $0x8] sm:$0xf]
    %v834 = vld [vmem:[%s830 + $0xc] sm:$0xf]
    %v835 = vld [vmem:[%s830 + $0x10] sm:$0xf]
    %v836 = vld [vmem:[%s830 + $0x14] sm:$0xf]
    %v837 = vld [vmem:[%s830 + $0x18] sm:$0xf]
    %v838 = vld [vmem:[%s830 + $0x1c] sm:$0xf]
    %v839 = vld [vmem:[%s830 + $0x20] sm:$0xf]
    %v840 = vld [vmem:[%s830 + $0x24] sm:$0xf]
    %v841 = vld [vmem:[%s830 + $0x28] sm:$0xf]
    %v842 = vld [vmem:[%s830 + $0x2c] sm:$0xf]
    %v843 = vld [vmem:[%s830 + $0x30] sm:$0xf]
    %v844 = vld [vmem:[%s830 + $0x34] sm:$0xf]
    %v845 = vld [vmem:[%s830 + $0x38] sm:$0xf]
    %v846 = vld [vmem:[%s830 + $0x3c] sm:$0xf]
    %v848 = vlaneseq
    %v849 = vshrl.u32 %v848, 7
    %v850 = vsub.s32 0, %v849
    %v851 = vrot.slane %v79, %v850
    %v869 = vunpack.c.l.b16 %v831
    %v870 = vunpack.c.l.b16 %v832
    %v871 = vunpack.c.l.b16 %v833
    %v872 = vunpack.c.l.b16 %v834
    %v873 = vunpack.c.l.b16 %v835
    %v874 = vunpack.c.l.b16 %v836
    %v875 = vunpack.c.l.b16 %v837
    %v876 = vunpack.c.l.b16 %v838
    %v877 = vunpack.c.l.b16 %v839
    %v878 = vunpack.c.l.b16 %v840
    %v879 = vunpack.c.l.b16 %v841
    %v880 = vunpack.c.l.b16 %v842
    %v881 = vunpack.c.l.b16 %v843
    %v882 = vunpack.c.l.b16 %v844
    %v883 = vunpack.c.l.b16 %v845
    %v884 = vunpack.c.l.b16 %v846
    %v885 = vpack.c.b16 %v870, %v869
    %v886 = vpack.c.b16 %v872, %v871
    %v887 = vpack.c.b16 %v874, %v873
    %v888 = vpack.c.b16 %v876, %v875
    %v889 = vpack.c.b16 %v878, %v877
    %v890 = vpack.c.b16 %v880, %v879
    %v891 = vpack.c.b16 %v882, %v881
    %v892 = vpack.c.b16 %v884, %v883
    %901 = vmatprep.subr.bf16.mxu0 0
    %902 = vmatpush1.bf16.msra.mxu0 %v892
    %903 = vmatprep.subr.bf16.mxu0 0
    %904 = vmatpush1.bf16.msra.mxu0 %v891
    %905 = vmatprep.subr.bf16.mxu0 0
    %906 = vmatpush1.bf16.msra.mxu0 %v890
    %907 = vmatprep.subr.bf16.mxu0 0
    %908 = vmatpush1.bf16.msra.mxu0 %v889
    %909 = vmatprep.subr.bf16.mxu0 0
    %910 = vmatpush1.bf16.msra.mxu0 %v888
    %911 = vmatprep.subr.bf16.mxu0 0
    %912 = vmatpush1.bf16.msra.mxu0 %v887
    %913 = vmatprep.subr.bf16.mxu0 0
    %914 = vmatpush1.bf16.msra.mxu0 %v886
    %915 = vmatprep.subr.bf16.mxu0 0
    %916 = vmatpush1.bf16.msra.mxu0 %v885
    %917 = vmatprep.subr.bf16.mxu0 0
    %918 = vmatpush2.bf16.msra.mxu0 0
    %919 = vmatprep.subr.bf16.mxu0 0
    %920 = vmatpush2.bf16.msra.mxu0 0
    %921 = vmatprep.subr.bf16.mxu0 0
    %922 = vmatpush2.bf16.msra.mxu0 0
    %923 = vmatprep.subr.bf16.mxu0 0
    %924 = vmatpush2.bf16.msra.mxu0 0
    %925 = vmatprep.subr.bf16.mxu0 0
    %926 = vmatpush2.bf16.msra.mxu0 0
    %927 = vmatprep.subr.bf16.mxu0 0
    %928 = vmatpush2.bf16.msra.mxu0 0
    %929 = vmatprep.subr.bf16.mxu0 0
    %930 = vmatpush2.bf16.msra.mxu0 0
    %931 = vmatprep.subr.bf16.mxu0 0
    %932 = vmatpush2.bf16.msra.mxu0 0
    %933 = vmatprep.mubr.bf16.mxu0 0
    %934 = vmatmul.mubr.bf16.gmra.mxu0 %v829
    %v935 = vpop.f32.mrf.mxu0
    %v936 = vadd.f32 %v851, %v935
    %v937 = vpop.f32.mrf.mxu0
    %v938 = vpop.f32.mrf.mxu0
    %v939 = vpop.f32.mrf.mxu0
    %940 = vdwg.mxu0
    %v941 = vmax.f32 %v936, 0.0
    %v942 = vpack.c.bf16 %v941, %v941
    %s943 = scalar_lea.vmem [#allocation7], 448
    %v944 = vld [vmem:[%s943] sm:$0xf]
    %v945 = vld [vmem:[%s943 + $0x4] sm:$0xf]
    %v946 = vld [vmem:[%s943 + $0x8] sm:$0xf]
    %v947 = vld [vmem:[%s943 + $0xc] sm:$0xf]
    %v948 = vld [vmem:[%s943 + $0x10] sm:$0xf]
    %v949 = vld [vmem:[%s943 + $0x14] sm:$0xf]
    %v950 = vld [vmem:[%s943 + $0x18] sm:$0xf]
    %v951 = vld [vmem:[%s943 + $0x1c] sm:$0xf]
    %v952 = vld [vmem:[%s943 + $0x20] sm:$0xf]
    %v953 = vld [vmem:[%s943 + $0x24] sm:$0xf]
    %v954 = vld [vmem:[%s943 + $0x28] sm:$0xf]
    %v955 = vld [vmem:[%s943 + $0x2c] sm:$0xf]
    %v956 = vld [vmem:[%s943 + $0x30] sm:$0xf]
    %v957 = vld [vmem:[%s943 + $0x34] sm:$0xf]
    %v958 = vld [vmem:[%s943 + $0x38] sm:$0xf]
    %v959 = vld [vmem:[%s943 + $0x3c] sm:$0xf]
    %v961 = vlaneseq
    %v962 = vshrl.u32 %v961, 7
    %v963 = vsub.s32 0, %v962
    %v964 = vrot.slane %v80, %v963
    %v982 = vunpack.c.l.b16 %v944
    %v983 = vunpack.c.l.b16 %v945
    %v984 = vunpack.c.l.b16 %v946
    %v985 = vunpack.c.l.b16 %v947
    %v986 = vunpack.c.l.b16 %v948
    %v987 = vunpack.c.l.b16 %v949
    %v988 = vunpack.c.l.b16 %v950
    %v989 = vunpack.c.l.b16 %v951
    %v990 = vunpack.c.l.b16 %v952
    %v991 = vunpack.c.l.b16 %v953
    %v992 = vunpack.c.l.b16 %v954
    %v993 = vunpack.c.l.b16 %v955
    %v994 = vunpack.c.l.b16 %v956
    %v995 = vunpack.c.l.b16 %v957
    %v996 = vunpack.c.l.b16 %v958
    %v997 = vunpack.c.l.b16 %v959
    %v998 = vpack.c.b16 %v983, %v982
    %v999 = vpack.c.b16 %v985, %v984
    %v1000 = vpack.c.b16 %v987, %v986
    %v1001 = vpack.c.b16 %v989, %v988
    %v1002 = vpack.c.b16 %v991, %v990
    %v1003 = vpack.c.b16 %v993, %v992
    %v1004 = vpack.c.b16 %v995, %v994
    %v1005 = vpack.c.b16 %v997, %v996
    %1014 = vmatprep.subr.bf16.mxu0 0
    %1015 = vmatpush1.bf16.msra.mxu0 %v1005
    %1016 = vmatprep.subr.bf16.mxu0 0
    %1017 = vmatpush1.bf16.msra.mxu0 %v1004
    %1018 = vmatprep.subr.bf16.mxu0 0
    %1019 = vmatpush1.bf16.msra.mxu0 %v1003
    %1020 = vmatprep.subr.bf16.mxu0 0
    %1021 = vmatpush1.bf16.msra.mxu0 %v1002
    %1022 = vmatprep.subr.bf16.mxu0 0
    %1023 = vmatpush1.bf16.msra.mxu0 %v1001
    %1024 = vmatprep.subr.bf16.mxu0 0
    %1025 = vmatpush1.bf16.msra.mxu0 %v1000
    %1026 = vmatprep.subr.bf16.mxu0 0
    %1027 = vmatpush1.bf16.msra.mxu0 %v999
    %1028 = vmatprep.subr.bf16.mxu0 0
    %1029 = vmatpush1.bf16.msra.mxu0 %v998
    %1030 = vmatprep.subr.bf16.mxu0 0
    %1031 = vmatpush2.bf16.msra.mxu0 0
    %1032 = vmatprep.subr.bf16.mxu0 0
    %1033 = vmatpush2.bf16.msra.mxu0 0
    %1034 = vmatprep.subr.bf16.mxu0 0
    %1035 = vmatpush2.bf16.msra.mxu0 0
    %1036 = vmatprep.subr.bf16.mxu0 0
    %1037 = vmatpush2.bf16.msra.mxu0 0
    %1038 = vmatprep.subr.bf16.mxu0 0
    %1039 = vmatpush2.bf16.msra.mxu0 0
    %1040 = vmatprep.subr.bf16.mxu0 0
    %1041 = vmatpush2.bf16.msra.mxu0 0
    %1042 = vmatprep.subr.bf16.mxu0 0
    %1043 = vmatpush2.bf16.msra.mxu0 0
    %1044 = vmatprep.subr.bf16.mxu0 0
    %1045 = vmatpush2.bf16.msra.mxu0 0
    %1046 = vmatprep.mubr.bf16.mxu0 0
    %1047 = vmatmul.mubr.bf16.gmra.mxu0 %v942
    %v1048 = vpop.f32.mrf.mxu0
    %v1049 = vadd.f32 %v964, %v1048
    %v1050 = vpop.f32.mrf.mxu0
    %v1051 = vpop.f32.mrf.mxu0
    %v1052 = vpop.f32.mrf.mxu0
    %1053 = vdwg.mxu0
    %v1054 = vmax.f32 %v1049, 0.0
    %v1055 = vpack.c.bf16 %v1054, %v1054
    %s1056 = scalar_lea.vmem [#allocation7], 512
    %v1057 = vld [vmem:[%s1056] sm:$0xf]
    %v1058 = vld [vmem:[%s1056 + $0x4] sm:$0xf]
    %v1059 = vld [vmem:[%s1056 + $0x8] sm:$0xf]
    %v1060 = vld [vmem:[%s1056 + $0xc] sm:$0xf]
    %v1061 = vld [vmem:[%s1056 + $0x10] sm:$0xf]
    %v1062 = vld [vmem:[%s1056 + $0x14] sm:$0xf]
    %v1063 = vld [vmem:[%s1056 + $0x18] sm:$0xf]
    %v1064 = vld [vmem:[%s1056 + $0x1c] sm:$0xf]
    %v1065 = vld [vmem:[%s1056 + $0x20] sm:$0xf]
    %v1066 = vld [vmem:[%s1056 + $0x24] sm:$0xf]
    %v1067 = vld [vmem:[%s1056 + $0x28] sm:$0xf]
    %v1068 = vld [vmem:[%s1056 + $0x2c] sm:$0xf]
    %v1069 = vld [vmem:[%s1056 + $0x30] sm:$0xf]
    %v1070 = vld [vmem:[%s1056 + $0x34] sm:$0xf]
    %v1071 = vld [vmem:[%s1056 + $0x38] sm:$0xf]
    %v1072 = vld [vmem:[%s1056 + $0x3c] sm:$0xf]
    %v1074 = vlaneseq
    %v1075 = vshrl.u32 %v1074, 7
    %v1076 = vsub.s32 0, %v1075
    %v1077 = vrot.slane %v81, %v1076
    %v1095 = vunpack.c.l.b16 %v1057
    %v1096 = vunpack.c.l.b16 %v1058
    %v1097 = vunpack.c.l.b16 %v1059
    %v1098 = vunpack.c.l.b16 %v1060
    %v1099 = vunpack.c.l.b16 %v1061
    %v1100 = vunpack.c.l.b16 %v1062
    %v1101 = vunpack.c.l.b16 %v1063
    %v1102 = vunpack.c.l.b16 %v1064
    %v1103 = vunpack.c.l.b16 %v1065
    %v1104 = vunpack.c.l.b16 %v1066
    %v1105 = vunpack.c.l.b16 %v1067
    %v1106 = vunpack.c.l.b16 %v1068
    %v1107 = vunpack.c.l.b16 %v1069
    %v1108 = vunpack.c.l.b16 %v1070
    %v1109 = vunpack.c.l.b16 %v1071
    %v1110 = vunpack.c.l.b16 %v1072
    %v1111 = vpack.c.b16 %v1096, %v1095
    %v1112 = vpack.c.b16 %v1098, %v1097
    %v1113 = vpack.c.b16 %v1100, %v1099
    %v1114 = vpack.c.b16 %v1102, %v1101
    %v1115 = vpack.c.b16 %v1104, %v1103
    %v1116 = vpack.c.b16 %v1106, %v1105
    %v1117 = vpack.c.b16 %v1108, %v1107
    %v1118 = vpack.c.b16 %v1110, %v1109
    %1127 = vmatprep.subr.bf16.mxu0 0
    %1128 = vmatpush1.bf16.msra.mxu0 %v1118
    %1129 = vmatprep.subr.bf16.mxu0 0
    %1130 = vmatpush1.bf16.msra.mxu0 %v1117
    %1131 = vmatprep.subr.bf16.mxu0 0
    %1132 = vmatpush1.bf16.msra.mxu0 %v1116
    %1133 = vmatprep.subr.bf16.mxu0 0
    %1134 = vmatpush1.bf16.msra.mxu0 %v1115
    %1135 = vmatprep.subr.bf16.mxu0 0
    %1136 = vmatpush1.bf16.msra.mxu0 %v1114
    %1137 = vmatprep.subr.bf16.mxu0 0
    %1138 = vmatpush1.bf16.msra.mxu0 %v1113
    %1139 = vmatprep.subr.bf16.mxu0 0
    %1140 = vmatpush1.bf16.msra.mxu0 %v1112
    %1141 = vmatprep.subr.bf16.mxu0 0
    %1142 = vmatpush1.bf16.msra.mxu0 %v1111
    %1143 = vmatprep.subr.bf16.mxu0 0
    %1144 = vmatpush2.bf16.msra.mxu0 0
    %1145 = vmatprep.subr.bf16.mxu0 0
    %1146 = vmatpush2.bf16.msra.mxu0 0
    %1147 = vmatprep.subr.bf16.mxu0 0
    %1148 = vmatpush2.bf16.msra.mxu0 0
    %1149 = vmatprep.subr.bf16.mxu0 0
    %1150 = vmatpush2.bf16.msra.mxu0 0
    %1151 = vmatprep.subr.bf16.mxu0 0
    %1152 = vmatpush2.bf16.msra.mxu0 0
    %1153 = vmatprep.subr.bf16.mxu0 0
    %1154 = vmatpush2.bf16.msra.mxu0 0
    %1155 = vmatprep.subr.bf16.mxu0 0
    %1156 = vmatpush2.bf16.msra.mxu0 0
    %1157 = vmatprep.subr.bf16.mxu0 0
    %1158 = vmatpush2.bf16.msra.mxu0 0
    %1159 = vmatprep.mubr.bf16.mxu0 0
    %1160 = vmatmul.mubr.bf16.gmra.mxu0 %v1055
    %v1161 = vpop.f32.mrf.mxu0
    %v1162 = vadd.f32 %v1077, %v1161
    %v1163 = vpop.f32.mrf.mxu0
    %v1164 = vpop.f32.mrf.mxu0
    %v1165 = vpop.f32.mrf.mxu0
    %1166 = vdwg.mxu0
    %v1167 = vmax.f32 %v1162, 0.0
    %v1168 = vpack.c.bf16 %v1167, %v1167
    %s1169 = scalar_lea.vmem [#allocation7], 576
    %v1170 = vld [vmem:[%s1169] sm:$0xf]
    %v1171 = vld [vmem:[%s1169 + $0x4] sm:$0xf]
    %v1172 = vld [vmem:[%s1169 + $0x8] sm:$0xf]
    %v1173 = vld [vmem:[%s1169 + $0xc] sm:$0xf]
    %v1174 = vld [vmem:[%s1169 + $0x10] sm:$0xf]
    %v1175 = vld [vmem:[%s1169 + $0x14] sm:$0xf]
    %v1176 = vld [vmem:[%s1169 + $0x18] sm:$0xf]
    %v1177 = vld [vmem:[%s1169 + $0x1c] sm:$0xf]
    %v1178 = vld [vmem:[%s1169 + $0x20] sm:$0xf]
    %v1179 = vld [vmem:[%s1169 + $0x24] sm:$0xf]
    %v1180 = vld [vmem:[%s1169 + $0x28] sm:$0xf]
    %v1181 = vld [vmem:[%s1169 + $0x2c] sm:$0xf]
    %v1182 = vld [vmem:[%s1169 + $0x30] sm:$0xf]
    %v1183 = vld [vmem:[%s1169 + $0x34] sm:$0xf]
    %v1184 = vld [vmem:[%s1169 + $0x38] sm:$0xf]
    %v1185 = vld [vmem:[%s1169 + $0x3c] sm:$0xf]
    %v1187 = vlaneseq
    %v1188 = vshrl.u32 %v1187, 7
    %v1189 = vsub.s32 0, %v1188
    %v1190 = vrot.slane %v82, %v1189
    %v1208 = vunpack.c.l.b16 %v1170
    %v1209 = vunpack.c.l.b16 %v1171
    %v1210 = vunpack.c.l.b16 %v1172
    %v1211 = vunpack.c.l.b16 %v1173
    %v1212 = vunpack.c.l.b16 %v1174
    %v1213 = vunpack.c.l.b16 %v1175
    %v1214 = vunpack.c.l.b16 %v1176
    %v1215 = vunpack.c.l.b16 %v1177
    %v1216 = vunpack.c.l.b16 %v1178
    %v1217 = vunpack.c.l.b16 %v1179
    %v1218 = vunpack.c.l.b16 %v1180
    %v1219 = vunpack.c.l.b16 %v1181
    %v1220 = vunpack.c.l.b16 %v1182
    %v1221 = vunpack.c.l.b16 %v1183
    %v1222 = vunpack.c.l.b16 %v1184
    %v1223 = vunpack.c.l.b16 %v1185
    %v1224 = vpack.c.b16 %v1209, %v1208
    %v1225 = vpack.c.b16 %v1211, %v1210
    %v1226 = vpack.c.b16 %v1213, %v1212
    %v1227 = vpack.c.b16 %v1215, %v1214
    %v1228 = vpack.c.b16 %v1217, %v1216
    %v1229 = vpack.c.b16 %v1219, %v1218
    %v1230 = vpack.c.b16 %v1221, %v1220
    %v1231 = vpack.c.b16 %v1223, %v1222
    %1240 = vmatprep.subr.bf16.mxu0 0
    %1241 = vmatpush1.bf16.msra.mxu0 %v1231
    %1242 = vmatprep.subr.bf16.mxu0 0
    %1243 = vmatpush1.bf16.msra.mxu0 %v1230
    %1244 = vmatprep.subr.bf16.mxu0 0
    %1245 = vmatpush1.bf16.msra.mxu0 %v1229
    %1246 = vmatprep.subr.bf16.mxu0 0
    %1247 = vmatpush1.bf16.msra.mxu0 %v1228
    %1248 = vmatprep.subr.bf16.mxu0 0
    %1249 = vmatpush1.bf16.msra.mxu0 %v1227
    %1250 = vmatprep.subr.bf16.mxu0 0
    %1251 = vmatpush1.bf16.msra.mxu0 %v1226
    %1252 = vmatprep.subr.bf16.mxu0 0
    %1253 = vmatpush1.bf16.msra.mxu0 %v1225
    %1254 = vmatprep.subr.bf16.mxu0 0
    %1255 = vmatpush1.bf16.msra.mxu0 %v1224
    %1256 = vmatprep.subr.bf16.mxu0 0
    %1257 = vmatpush2.bf16.msra.mxu0 0
    %1258 = vmatprep.subr.bf16.mxu0 0
    %1259 = vmatpush2.bf16.msra.mxu0 0
    %1260 = vmatprep.subr.bf16.mxu0 0
    %1261 = vmatpush2.bf16.msra.mxu0 0
    %1262 = vmatprep.subr.bf16.mxu0 0
    %1263 = vmatpush2.bf16.msra.mxu0 0
    %1264 = vmatprep.subr.bf16.mxu0 0
    %1265 = vmatpush2.bf16.msra.mxu0 0
    %1266 = vmatprep.subr.bf16.mxu0 0
    %1267 = vmatpush2.bf16.msra.mxu0 0
    %1268 = vmatprep.subr.bf16.mxu0 0
    %1269 = vmatpush2.bf16.msra.mxu0 0
    %1270 = vmatprep.subr.bf16.mxu0 0
    %1271 = vmatpush2.bf16.msra.mxu0 0
    %1272 = vmatprep.mubr.bf16.mxu0 0
    %1273 = vmatmul.mubr.bf16.gmra.mxu0 %v1168
    %v1274 = vpop.f32.mrf.mxu0
    %v1275 = vadd.f32 %v1190, %v1274
    %v1276 = vpop.f32.mrf.mxu0
    %v1277 = vpop.f32.mrf.mxu0
    %v1278 = vpop.f32.mrf.mxu0
    %1279 = vdwg.mxu0
    %v1280 = vlaneseq
    %v1281 = vand.u32 %v1280, 127
    %vm1282 = vcmp.lt.s32.totalorder %v1281, 2
    %v1283 = vsel %vm1282, %v1275, -1e+30
    %vm1284 = vcmask 1041408
    %v1285 = vsel %vm1284, %v1283, -inf
    %1286 = vmax.xlane.f32.xlu0 %v1285
    %v1287 = vpop.xlane.xlu0 %1286
    %v1288 = vsub.f32 %v1283, %v1287
    %v1289 = vmul.f32 %v1288, 1.442695
    %v1290 = vpow.pop %v1289
    %v1291 = vsel %vm1284, %v1290, 0.0
    %1292 = vadd.xlane.f32.xlu0 %v1291
    %v1293 = vpop.xlane.xlu0 %1292
    %v1294 = vrcp.pop %v1293
    %v1295 = vmul.f32 %v1290, %v1294
    %1296 = vst [vmem:[#allocation10] sm:$0x3] %v1295
    // Predicated region
    $region34: #{_dnn_forward_impl.1} parent=1 // pred_check
      _
    $region35: #{_dnn_forward_impl.1} parent=1 // pred_check_branch
      %1298 = sbr.rel (0) target = $region37
    $region36: #{_dnn_forward_impl.1} parent=1 // pred_region
      %s1300 = ssub.s32 32, 32
      %1301 = vsyncadd [#allocation4], %s1300
      %s1303 = sshll.u32 [#allocation10], 4
      %s1304 = int_to_ptr.vmem [resolvable:$true] %s1303
      %1306 = dma.vmem_to_hbm [thread:$0]  %s1304, 32, %s4, [#allocation4]
    $region37: #{_dnn_forward_impl.1} parent=1 // pred_fallthru
      _
    // Predicated region
    $region38: #{_dnn_forward_impl.1} parent=1 // pred_check
      _
    $region39: #{_dnn_forward_impl.1} parent=1 // pred_check_branch
      %1308 = sbr.rel (0) target = $region41
    $region40: #{_dnn_forward_impl.1} parent=1 // pred_region
      %1309 = dma.done [#allocation4], 32
    $region41: #{_dnn_forward_impl.1} parent=1 // pred_fallthru
      _
    %1310 = vsyncpa [#allocation3], 1
    %1311 = vsyncpa [#allocation6], 1
    %1312 = vsyncpa [#allocation9], 1
    %1313 = vsyncpa [#allocation4], 1

</llo_original>
